<compile_context>
chip_gen: v7x
topology: tpu7x:2x2x1
jax: 0.10.0
libtpu: 0.0.40
codegen_flags: <defaults>
</compile_context>

<pallas_src>
import functools

import jax
import jax.numpy as jnp
from jax import lax
from jax.experimental import pallas as pl
from jax.experimental.pallas import tpu as pltpu


# ----------------------------------------------------------------------------
# Fused Pallas kernel
# ----------------------------------------------------------------------------
def _trlstm_kernel(
    xs_ref,        # (B, nstatic)
    xd_in_ref,     # (T*B, nstatic + nera)      time-major flattened
    temp_ref,      # (T*B, H)                   time-major flattened
    mlp_w_ref,     # (nstatic, SH)
    mlp_b_ref,     # (1, SH)
    xd_w_ref,      # (nstatic + nera, H)
    xd_b_ref,      # (1, H)
    wih_ref,       # (L, H, 4H)
    whh_ref,       # (L, H, 4H)
    b_ref,         # (L, 1, 4H)
    fcw_h_ref,     # (1, H)    fc_out weight, LSTM-hidden part
    fcw_s_ref,     # (1, SH)   fc_out weight, static-hidden part
    fcb_ref,       # (1, 1)
    out_ref,       # (B, F)
    seq_scr,       # VMEM (T*B, H)   layer input/output sequence
    gx_scr,        # VMEM (T*B, 4H)  hoisted input-projection gates
    *,
    T, B, H, F, L,
):
    # ---- static branch: MLP_static (Linear -> ReLU; dropout = identity) ----
    xs_h = jnp.maximum(
        jnp.dot(xs_ref[...], mlp_w_ref[...], preferred_element_type=jnp.float32)
        + mlp_b_ref[...],
        0.0,
    )  # (B, SH)
    # static contribution to fc_out (VPU reduction, reused for every t)
    y_stat = jnp.sum(xs_h * fcw_s_ref[...], axis=-1, keepdims=True)  # (B, 1)

    # ---- dynamic input projection + temporal embedding add -----------------
    seq_scr[...] = (
        jnp.dot(xd_in_ref[...], xd_w_ref[...], preferred_element_type=jnp.float32)
        + xd_b_ref[...]
        + temp_ref[...]
    )  # (T*B, H), rows ordered time-major: row = t*B + b

    # ---- stacked LSTM (inter-layer dropout = identity at eval) -------------
    for l in range(L):
        # Hoisted input projection: one matmul for the whole sequence.
        gx_scr[...] = (
            jnp.dot(seq_scr[...], wih_ref[l], preferred_element_type=jnp.float32)
            + b_ref[l]
        )  # (T*B, 4H), PyTorch gate order: i, f, g, o

        whh = whh_ref[l]  # (H, 4H), loaded once per layer
        h = jnp.zeros((B, H), jnp.float32)
        c = jnp.zeros((B, H), jnp.float32)

        for t in range(T):  # fully static unrolled recurrence
            g = (
                jnp.dot(h, whh, preferred_element_type=jnp.float32)
                + gx_scr[t * B:(t + 1) * B, :]
            )  # (B, 4H)
            sg = jax.nn.sigmoid(g)                 # one full-width EUP pass (i, f, o)
            tg = jnp.tanh(g[:, 2 * H:3 * H])       # tanh only on the g strip
            i_g = sg[:, 0:H]
            f_g = sg[:, H:2 * H]
            o_g = sg[:, 3 * H:4 * H]
            c = f_g * c + i_g * tg
            h = o_g * jnp.tanh(c)

            if l < L - 1:
                # feed next layer (gx for this layer already consumed the old rows)
                seq_scr[t * B:(t + 1) * B, :] = h
            elif t >= T - F:
                # final layer, last F steps: fused fc_out (VPU reduction) + softplus
                y = (
                    jnp.sum(h * fcw_h_ref[...], axis=-1, keepdims=True)
                    + y_stat
                    + fcb_ref[...]
                )  # (B, 1)
                # matches torch.nn.functional.softplus (beta=1, threshold=20)
                y = jnp.where(y > 20.0, y, jnp.log1p(jnp.exp(jnp.minimum(y, 20.0))))
                j = t - (T - F)
                out_ref[:, j:j + 1] = y


def trlstm_forward(params, Xs, Xd_dyn, Xdate, config):
    B = Xs.shape[0]
    T = config["plen"] + config["flen"]
    H = config["hidden_size"]
    SH = config["static_hidden_size"]
    F = config["flen"]
    L = config["num_layers"]
    nstatic = Xs.shape[-1]

    # -------- JAX glue (tiny tensors): embedding gathers, concat, layout ----
    # TODO(synk): embedding-table gathers (TempEmbed) stay in plain JAX.
    xd_idx = Xdate.astype(jnp.int32)
    temp_emb = (
        jnp.take(params["h_emb"], xd_idx[..., 2], axis=0)
        + jnp.take(params["m_emb"], xd_idx[..., 0], axis=0)
        + jnp.take(params["d_emb"], xd_idx[..., 1], axis=0)
    )  # (B, T, H)
    xs_exp = jnp.broadcast_to(Xs[:, None, :], (B, T, nstatic))
    xd_in = jnp.concatenate([xs_exp, Xd_dyn], axis=-1)  # (B, T, nstatic + nera)

    # time-major flatten so the recurrence reads contiguous (B, .) row slabs
    xd_in_tm = jnp.transpose(xd_in, (1, 0, 2)).reshape(T * B, nstatic + Xd_dyn.shape[-1])
    temp_tm = jnp.transpose(temp_emb, (1, 0, 2)).reshape(T * B, H)

    wih = jnp.stack(params["lstm_wih"], axis=0)                       # (L, H, 4H)
    whh = jnp.stack(params["lstm_whh"], axis=0)                       # (L, H, 4H)
    bs = jnp.stack([b.reshape(1, 4 * H) for b in params["lstm_b"]], axis=0)  # (L, 1, 4H)

    fcw_h = params["fc_w"][:H, 0].reshape(1, H)
    fcw_s = params["fc_w"][H:, 0].reshape(1, SH)
    fcb = params["fc_b"].reshape(1, 1)

    kernel = functools.partial(_trlstm_kernel, T=T, B=B, H=H, F=F, L=L)
    out = pl.pallas_call(
        kernel,
        out_shape=jax.ShapeDtypeStruct((B, F), jnp.float32),
        scratch_shapes=[
            pltpu.VMEM((T * B, H), jnp.float32),      # seq_scr
            pltpu.VMEM((T * B, 4 * H), jnp.float32),  # gx_scr
        ],
    )(
        Xs, xd_in_tm, temp_tm,
        params["mlp_w"], params["mlp_b"].reshape(1, SH),
        params["xd_w"], params["xd_b"].reshape(1, H),
        wih, whh, bs,
        fcw_h, fcw_s, fcb,
    )
    return out  # (B, F)


# ----------------------------------------------------------------------------
# Parameter init (deterministic, synthetic)
# ----------------------------------------------------------------------------
def init_params(key, config):
    H = config["hidden_size"]
    SH = config["static_hidden_size"]
    nstatic = len(config["staticFeatures"])
    nera = len(config["eraFeatures"])
    L = config["num_layers"]

    ks = jax.random.split(key, 16)

    def w(k, shape, scale=0.1):
        return (scale * jax.random.normal(k, shape)).astype(jnp.float32)

    params = {
        "mlp_w": w(ks[0], (nstatic, SH)),
        "mlp_b": w(ks[1], (SH,), 0.01),
        "m_emb": w(ks[2], (13, H)),
        "d_emb": w(ks[3], (32, H)),
        "h_emb": w(ks[4], (24, H)),
        "xd_w": w(ks[5], (nstatic + nera, H)),
        "xd_b": w(ks[6], (H,), 0.01),
        "fc_w": w(ks[7], (H + SH, 1)),
        "fc_b": w(ks[8], (1,), 0.01),
    }
    lstm_keys = jax.random.split(ks[9], 3 * L)
    wih, whh, bias = [], [], []
    for l in range(L):
        wih.append(w(lstm_keys[3 * l + 0], (H, 4 * H)))
        whh.append(w(lstm_keys[3 * l + 1], (H, 4 * H)))
        bias.append(w(lstm_keys[3 * l + 2], (4 * H,), 0.01))
    params["lstm_wih"] = wih
    params["lstm_whh"] = whh
    params["lstm_b"] = bias
    return params


# ----------------------------------------------------------------------------
# Pure-JAX reference (for correctness check)
# ----------------------------------------------------------------------------
def ref_lstm_layer(x_tm, wih_t, whh_t, b):
    H = whh_t.shape[0]
    B = x_tm.shape[1]

    def step(carry, x_t):
        h, c = carry
        g = x_t @ wih_t + h @ whh_t + b
        i = jax.nn.sigmoid(g[:, 0:H])
        f = jax.nn.sigmoid(g[:, H:2 * H])
        gg = jnp.tanh(g[:, 2 * H:3 * H])
        o = jax.nn.sigmoid(g[:, 3 * H:4 * H])
        c = f * c + i * gg
        h = o * jnp.tanh(c)
        return (h, c), h

    init = (jnp.zeros((B, H), jnp.float32), jnp.zeros((B, H), jnp.float32))
    _, ys = lax.scan(step, init, x_tm)
    return ys


def trlstm_forward_ref(params, Xs, Xd_dyn, Xdate, config):
    B = Xs.shape[0]
    T = config["plen"] + config["flen"]
    H = config["hidden_size"]
    SH = config["static_hidden_size"]
    F = config["flen"]
    nstatic = Xs.shape[-1]

    xs_exp = jnp.broadcast_to(Xs[:, None, :], (B, T, nstatic))
    xs_h = jnp.maximum(Xs @ params["mlp_w"] + params["mlp_b"], 0.0)
    xd_in = jnp.concatenate([xs_exp, Xd_dyn], axis=-1)

    xd_idx = Xdate.astype(jnp.int32)
    temp_emb = (
        jnp.take(params["h_emb"], xd_idx[..., 2], axis=0)
        + jnp.take(params["m_emb"], xd_idx[..., 0], axis=0)
        + jnp.take(params["d_emb"], xd_idx[..., 1], axis=0)
    )
    xd_proj = xd_in @ params["xd_w"] + params["xd_b"] + temp_emb

    x_tm = jnp.transpose(xd_proj, (1, 0, 2))
    for l in range(config["num_layers"]):
        x_tm = ref_lstm_layer(
            x_tm, params["lstm_wih"][l], params["lstm_whh"][l], params["lstm_b"][l]
        )
    lstm_out = jnp.transpose(x_tm, (1, 0, 2))

    out = lstm_out[:, -F:, :]
    xs_h_exp = jnp.broadcast_to(xs_h[:, None, :], (B, F, SH))
    cat = jnp.concatenate([out, xs_h_exp], axis=-1)
    y = (cat @ params["fc_w"] + params["fc_b"])[..., 0]
    return jax.nn.softplus(y)


# ----------------------------------------------------------------------------
# Main
# ----------------------------------------------------------------------------
if __name__ == "__main__":
    config = {
        "hidden_size": 32,
        "static_hidden_size": 16,
        "plen": 6,
        "flen": 2,
        "static_key": "static",
        "dynamic_key": "dynamic",
        "date_key": "dates",
        "dropout": 0.1,          # identity at inference
        "dropout_static": 0.1,   # identity at inference
        "num_layers": 2,
        "staticFeatures": ["s0", "s1", "s2", "s3"],     # nstatic = 4
        "eraFeatures": ["e0", "e1", "e2", "e3", "e4"],  # nera = 5
        "ACTF": "ReLU",
    }

    B = 2
    T = config["plen"] + config["flen"]
    nstatic = len(config["staticFeatures"])
    nera = len(config["eraFeatures"])

    key = jax.random.PRNGKey(0)
    k_xs, k_xd, k_m, k_d, k_h, k_p = jax.random.split(key, 6)

    Xs = jax.random.normal(k_xs, (B, nstatic), dtype=jnp.float32)
    Xd = jax.random.normal(k_xd, (B, T, nera), dtype=jnp.float32)
    Xdate = jnp.stack(
        [
            jax.random.randint(k_m, (B, T), 0, 13),
            jax.random.randint(k_d, (B, T), 0, 32),
            jax.random.randint(k_h, (B, T), 0, 24),
        ],
        axis=-1,
    ).astype(jnp.int32)  # (B, T, 3)

    params = init_params(k_p, config)

    out = trlstm_forward(params, Xs, Xd, Xdate, config)
    out = jax.block_until_ready(out)

    ref = jax.block_until_ready(trlstm_forward_ref(params, Xs, Xd, Xdate, config))
    assert out.shape == (B, config["flen"])
    assert jnp.allclose(out, ref, rtol=1e-4, atol=1e-4), (out, ref)

    print("KERNEL_OK")
</pallas_src>

<mosaic_0001>
module attributes {stable_mosaic.version = 11 : i64} {
  func.func @_trlstm_kernel(%arg0: memref<2x4xf32, #tpu.memory_space<vmem>>, %arg1: memref<16x9xf32, #tpu.memory_space<vmem>>, %arg2: memref<16x32xf32, #tpu.memory_space<vmem>>, %arg3: memref<4x16xf32, #tpu.memory_space<vmem>>, %arg4: memref<1x16xf32, #tpu.memory_space<vmem>>, %arg5: memref<9x32xf32, #tpu.memory_space<vmem>>, %arg6: memref<1x32xf32, #tpu.memory_space<vmem>>, %arg7: memref<2x32x128xf32, #tpu.memory_space<vmem>>, %arg8: memref<2x32x128xf32, #tpu.memory_space<vmem>>, %arg9: memref<2x1x128xf32, #tpu.memory_space<vmem>>, %arg10: memref<1x32xf32, #tpu.memory_space<vmem>>, %arg11: memref<1x16xf32, #tpu.memory_space<vmem>>, %arg12: memref<1x1xf32, #tpu.memory_space<vmem>>, %arg13: memref<2x2xf32, #tpu.memory_space<vmem>>, %arg14: memref<16x32xf32, #tpu.memory_space<vmem>>, %arg15: memref<16x128xf32, #tpu.memory_space<vmem>>) attributes {dimension_semantics = [], scalar_prefetch = 0 : i64, scratch_operands = 2 : i64, tpu.core_type = #tpu.core_type<tc>} {
    %c0 = arith.constant 0 : index
    %c0_0 = arith.constant 0 : index
    %0 = vector.load %arg0[%c0, %c0_0] : memref<2x4xf32, #tpu.memory_space<vmem>>, vector<2x4xf32>
    %c0_1 = arith.constant 0 : index
    %c0_2 = arith.constant 0 : index
    %1 = vector.load %arg3[%c0_1, %c0_2] : memref<4x16xf32, #tpu.memory_space<vmem>>, vector<4x16xf32>
    %cst = arith.constant dense<0.000000e+00> : vector<2x16xf32>
    %2 = tpu.matmul %0, %1, %cst {dimension_numbers = #tpu.dot_dimension_numbers<[1], [0], [0], [1], [0, 0, 1, 1], [], []>} : vector<2x4xf32>, vector<4x16xf32>, vector<2x16xf32> -> vector<2x16xf32>
    %c0_3 = arith.constant 0 : index
    %c0_4 = arith.constant 0 : index
    %3 = vector.load %arg4[%c0_3, %c0_4] : memref<1x16xf32, #tpu.memory_space<vmem>>, vector<1x16xf32>
    %4 = vector.broadcast %3 : vector<1x16xf32> to vector<2x16xf32>
    %5 = arith.addf %2, %4 : vector<2x16xf32>
    %cst_5 = arith.constant 0.000000e+00 : f32
    %6 = vector.broadcast %cst_5 : f32 to vector<2x16xf32>
    %7 = arith.maximumf %5, %6 : vector<2x16xf32>
    %c0_6 = arith.constant 0 : index
    %c0_7 = arith.constant 0 : index
    %8 = vector.load %arg11[%c0_6, %c0_7] : memref<1x16xf32, #tpu.memory_space<vmem>>, vector<1x16xf32>
    %9 = vector.broadcast %8 : vector<1x16xf32> to vector<2x16xf32>
    %10 = arith.mulf %7, %9 : vector<2x16xf32>
    %cst_8 = arith.constant dense<0.000000e+00> : vector<2xf32>
    %11 = vector.multi_reduction <add>, %10, %cst_8 [1] : vector<2x16xf32> to vector<2xf32>
    %12 = vector.shape_cast %11 : vector<2xf32> to vector<2x1xf32>
    %c0_9 = arith.constant 0 : index
    %c0_10 = arith.constant 0 : index
    %13 = vector.load %arg1[%c0_9, %c0_10] : memref<16x9xf32, #tpu.memory_space<vmem>>, vector<16x9xf32>
    %c0_11 = arith.constant 0 : index
    %c0_12 = arith.constant 0 : index
    %14 = vector.load %arg5[%c0_11, %c0_12] : memref<9x32xf32, #tpu.memory_space<vmem>>, vector<9x32xf32>
    %cst_13 = arith.constant dense<0.000000e+00> : vector<16x32xf32>
    %15 = tpu.matmul %13, %14, %cst_13 {dimension_numbers = #tpu.dot_dimension_numbers<[1], [0], [0], [1], [0, 0, 1, 1], [], []>} : vector<16x9xf32>, vector<9x32xf32>, vector<16x32xf32> -> vector<16x32xf32>
    %c0_14 = arith.constant 0 : index
    %c0_15 = arith.constant 0 : index
    %16 = vector.load %arg6[%c0_14, %c0_15] : memref<1x32xf32, #tpu.memory_space<vmem>>, vector<1x32xf32>
    %17 = vector.broadcast %16 : vector<1x32xf32> to vector<16x32xf32>
    %18 = arith.addf %15, %17 : vector<16x32xf32>
    %c0_16 = arith.constant 0 : index
    %c0_17 = arith.constant 0 : index
    %19 = vector.load %arg2[%c0_16, %c0_17] : memref<16x32xf32, #tpu.memory_space<vmem>>, vector<16x32xf32>
    %20 = arith.addf %18, %19 : vector<16x32xf32>
    %c0_18 = arith.constant 0 : index
    %c0_19 = arith.constant 0 : index
    %21 = vector.load %arg14[%c0_18, %c0_19] : memref<16x32xf32, #tpu.memory_space<vmem>>, vector<16x32xf32>
    tpu.vector_store %arg14[%c0_18, %c0_19], %20 {strides = array<i32>} : memref<16x32xf32, #tpu.memory_space<vmem>>, vector<16x32xf32>,
    %c0_20 = arith.constant 0 : index
    %c0_21 = arith.constant 0 : index
    %22 = vector.load %arg14[%c0_20, %c0_21] : memref<16x32xf32, #tpu.memory_space<vmem>>, vector<16x32xf32>
    %c0_22 = arith.constant 0 : index
    %c0_23 = arith.constant 0 : index
    %c0_24 = arith.constant 0 : index
    %23 = vector.load %arg7[%c0_22, %c0_23, %c0_24] : memref<2x32x128xf32, #tpu.memory_space<vmem>>, vector<1x32x128xf32>
    %24 = vector.shape_cast %23 : vector<1x32x128xf32> to vector<32x128xf32>
    %cst_25 = arith.constant dense<0.000000e+00> : vector<16x128xf32>
    %25 = tpu.matmul %22, %24, %cst_25 {dimension_numbers = #tpu.dot_dimension_numbers<[1], [0], [0], [1], [0, 0, 1, 1], [], []>} : vector<16x32xf32>, vector<32x128xf32>, vector<16x128xf32> -> vector<16x128xf32>
    %c0_26 = arith.constant 0 : index
    %c0_27 = arith.constant 0 : index
    %c0_28 = arith.constant 0 : index
    %26 = vector.load %arg9[%c0_26, %c0_27, %c0_28] : memref<2x1x128xf32, #tpu.memory_space<vmem>>, vector<1x1x128xf32>
    %27 = vector.shape_cast %26 : vector<1x1x128xf32> to vector<1x128xf32>
    %28 = vector.broadcast %27 : vector<1x128xf32> to vector<16x128xf32>
    %29 = arith.addf %25, %28 : vector<16x128xf32>
    %c0_29 = arith.constant 0 : index
    %c0_30 = arith.constant 0 : index
    %30 = vector.load %arg15[%c0_29, %c0_30] : memref<16x128xf32, #tpu.memory_space<vmem>>, vector<16x128xf32>
    tpu.vector_store %arg15[%c0_29, %c0_30], %29 {strides = array<i32>} : memref<16x128xf32, #tpu.memory_space<vmem>>, vector<16x128xf32>,
    %c0_31 = arith.constant 0 : index
    %c0_32 = arith.constant 0 : index
    %c0_33 = arith.constant 0 : index
    %31 = vector.load %arg8[%c0_31, %c0_32, %c0_33] : memref<2x32x128xf32, #tpu.memory_space<vmem>>, vector<1x32x128xf32>
    %32 = vector.shape_cast %31 : vector<1x32x128xf32> to vector<32x128xf32>
    %cst_34 = arith.constant 0.000000e+00 : f32
    %33 = vector.broadcast %cst_34 : f32 to vector<2x32xf32>
    %cst_35 = arith.constant 0.000000e+00 : f32
    %34 = vector.broadcast %cst_35 : f32 to vector<2x32xf32>
    %cst_36 = arith.constant dense<0.000000e+00> : vector<2x128xf32>
    %35 = tpu.matmul %33, %32, %cst_36 {dimension_numbers = #tpu.dot_dimension_numbers<[1], [0], [0], [1], [0, 0, 1, 1], [], []>} : vector<2x32xf32>, vector<32x128xf32>, vector<2x128xf32> -> vector<2x128xf32>
    %c0_37 = arith.constant 0 : index
    %c0_38 = arith.constant 0 : index
    %36 = vector.load %arg15[%c0_37, %c0_38] : memref<16x128xf32, #tpu.memory_space<vmem>>, vector<2x128xf32>
    %37 = arith.addf %35, %36 : vector<2x128xf32>
    %38 = arith.negf %37 : vector<2x128xf32>
    %39 = math.exp %38 : vector<2x128xf32>
    %cst_39 = arith.constant 1.000000e+00 : f32
    %40 = vector.broadcast %cst_39 : f32 to vector<2x128xf32>
    %41 = arith.addf %40, %39 : vector<2x128xf32>
    %42 = arith.divf %40, %41 : vector<2x128xf32>
    %43 = vector.extract_strided_slice %37 {offsets = [0, 64], sizes = [2, 32], strides = [1, 1]} : vector<2x128xf32> to vector<2x32xf32>
    %44 = math.tanh %43 : vector<2x32xf32>
    %45 = vector.extract_strided_slice %42 {offsets = [0, 0], sizes = [2, 32], strides = [1, 1]} : vector<2x128xf32> to vector<2x32xf32>
    %46 = vector.extract_strided_slice %42 {offsets = [0, 32], sizes = [2, 32], strides = [1, 1]} : vector<2x128xf32> to vector<2x32xf32>
    %47 = vector.extract_strided_slice %42 {offsets = [0, 96], sizes = [2, 32], strides = [1, 1]} : vector<2x128xf32> to vector<2x32xf32>
    %48 = arith.mulf %46, %34 : vector<2x32xf32>
    %49 = arith.mulf %45, %44 : vector<2x32xf32>
    %50 = arith.addf %48, %49 : vector<2x32xf32>
    %51 = math.tanh %50 : vector<2x32xf32>
    %52 = arith.mulf %47, %51 : vector<2x32xf32>
    %c0_40 = arith.constant 0 : index
    %c0_41 = arith.constant 0 : index
    %53 = vector.load %arg14[%c0_40, %c0_41] : memref<16x32xf32, #tpu.memory_space<vmem>>, vector<2x32xf32>
    tpu.vector_store %arg14[%c0_40, %c0_41], %52 {strides = array<i32>} : memref<16x32xf32, #tpu.memory_space<vmem>>, vector<2x32xf32>,
    %cst_42 = arith.constant dense<0.000000e+00> : vector<2x128xf32>
    %54 = tpu.matmul %52, %32, %cst_42 {dimension_numbers = #tpu.dot_dimension_numbers<[1], [0], [0], [1], [0, 0, 1, 1], [], []>} : vector<2x32xf32>, vector<32x128xf32>, vector<2x128xf32> -> vector<2x128xf32>
    %c2 = arith.constant 2 : index
    %c0_43 = arith.constant 0 : index
    %55 = vector.load %arg15[%c2, %c0_43] : memref<16x128xf32, #tpu.memory_space<vmem>>, vector<2x128xf32>
    %56 = arith.addf %54, %55 : vector<2x128xf32>
    %57 = arith.negf %56 : vector<2x128xf32>
    %58 = math.exp %57 : vector<2x128xf32>
    %cst_44 = arith.constant 1.000000e+00 : f32
    %59 = vector.broadcast %cst_44 : f32 to vector<2x128xf32>
    %60 = arith.addf %59, %58 : vector<2x128xf32>
    %61 = arith.divf %59, %60 : vector<2x128xf32>
    %62 = vector.extract_strided_slice %56 {offsets = [0, 64], sizes = [2, 32], strides = [1, 1]} : vector<2x128xf32> to vector<2x32xf32>
    %63 = math.tanh %62 : vector<2x32xf32>
    %64 = vector.extract_strided_slice %61 {offsets = [0, 0], sizes = [2, 32], strides = [1, 1]} : vector<2x128xf32> to vector<2x32xf32>
    %65 = vector.extract_strided_slice %61 {offsets = [0, 32], sizes = [2, 32], strides = [1, 1]} : vector<2x128xf32> to vector<2x32xf32>
    %66 = vector.extract_strided_slice %61 {offsets = [0, 96], sizes = [2, 32], strides = [1, 1]} : vector<2x128xf32> to vector<2x32xf32>
    %67 = arith.mulf %65, %50 : vector<2x32xf32>
    %68 = arith.mulf %64, %63 : vector<2x32xf32>
    %69 = arith.addf %67, %68 : vector<2x32xf32>
    %70 = math.tanh %69 : vector<2x32xf32>
    %71 = arith.mulf %66, %70 : vector<2x32xf32>
    %c2_45 = arith.constant 2 : index
    %c0_46 = arith.constant 0 : index
    %72 = vector.load %arg14[%c2_45, %c0_46] : memref<16x32xf32, #tpu.memory_space<vmem>>, vector<2x32xf32>
    tpu.vector_store %arg14[%c2_45, %c0_46], %71 {strides = array<i32>} : memref<16x32xf32, #tpu.memory_space<vmem>>, vector<2x32xf32>,
    %cst_47 = arith.constant dense<0.000000e+00> : vector<2x128xf32>
    %73 = tpu.matmul %71, %32, %cst_47 {dimension_numbers = #tpu.dot_dimension_numbers<[1], [0], [0], [1], [0, 0, 1, 1], [], []>} : vector<2x32xf32>, vector<32x128xf32>, vector<2x128xf32> -> vector<2x128xf32>
    %c4 = arith.constant 4 : index
    %c0_48 = arith.constant 0 : index
    %74 = vector.load %arg15[%c4, %c0_48] : memref<16x128xf32, #tpu.memory_space<vmem>>, vector<2x128xf32>
    %75 = arith.addf %73, %74 : vector<2x128xf32>
    %76 = arith.negf %75 : vector<2x128xf32>
    %77 = math.exp %76 : vector<2x128xf32>
    %cst_49 = arith.constant 1.000000e+00 : f32
    %78 = vector.broadcast %cst_49 : f32 to vector<2x128xf32>
    %79 = arith.addf %78, %77 : vector<2x128xf32>
    %80 = arith.divf %78, %79 : vector<2x128xf32>
    %81 = vector.extract_strided_slice %75 {offsets = [0, 64], sizes = [2, 32], strides = [1, 1]} : vector<2x128xf32> to vector<2x32xf32>
    %82 = math.tanh %81 : vector<2x32xf32>
    %83 = vector.extract_strided_slice %80 {offsets = [0, 0], sizes = [2, 32], strides = [1, 1]} : vector<2x128xf32> to vector<2x32xf32>
    %84 = vector.extract_strided_slice %80 {offsets = [0, 32], sizes = [2, 32], strides = [1, 1]} : vector<2x128xf32> to vector<2x32xf32>
    %85 = vector.extract_strided_slice %80 {offsets = [0, 96], sizes = [2, 32], strides = [1, 1]} : vector<2x128xf32> to vector<2x32xf32>
    %86 = arith.mulf %84, %69 : vector<2x32xf32>
    %87 = arith.mulf %83, %82 : vector<2x32xf32>
    %88 = arith.addf %86, %87 : vector<2x32xf32>
    %89 = math.tanh %88 : vector<2x32xf32>
    %90 = arith.mulf %85, %89 : vector<2x32xf32>
    %c4_50 = arith.constant 4 : index
    %c0_51 = arith.constant 0 : index
    %91 = vector.load %arg14[%c4_50, %c0_51] : memref<16x32xf32, #tpu.memory_space<vmem>>, vector<2x32xf32>
    tpu.vector_store %arg14[%c4_50, %c0_51], %90 {strides = array<i32>} : memref<16x32xf32, #tpu.memory_space<vmem>>, vector<2x32xf32>,
    %cst_52 = arith.constant dense<0.000000e+00> : vector<2x128xf32>
    %92 = tpu.matmul %90, %32, %cst_52 {dimension_numbers = #tpu.dot_dimension_numbers<[1], [0], [0], [1], [0, 0, 1, 1], [], []>} : vector<2x32xf32>, vector<32x128xf32>, vector<2x128xf32> -> vector<2x128xf32>
    %c6 = arith.constant 6 : index
    %c0_53 = arith.constant 0 : index
    %93 = vector.load %arg15[%c6, %c0_53] : memref<16x128xf32, #tpu.memory_space<vmem>>, vector<2x128xf32>
    %94 = arith.addf %92, %93 : vector<2x128xf32>
    %95 = arith.negf %94 : vector<2x128xf32>
    %96 = math.exp %95 : vector<2x128xf32>
    %cst_54 = arith.constant 1.000000e+00 : f32
    %97 = vector.broadcast %cst_54 : f32 to vector<2x128xf32>
    %98 = arith.addf %97, %96 : vector<2x128xf32>
    %99 = arith.divf %97, %98 : vector<2x128xf32>
    %100 = vector.extract_strided_slice %94 {offsets = [0, 64], sizes = [2, 32], strides = [1, 1]} : vector<2x128xf32> to vector<2x32xf32>
    %101 = math.tanh %100 : vector<2x32xf32>
    %102 = vector.extract_strided_slice %99 {offsets = [0, 0], sizes = [2, 32], strides = [1, 1]} : vector<2x128xf32> to vector<2x32xf32>
    %103 = vector.extract_strided_slice %99 {offsets = [0, 32], sizes = [2, 32], strides = [1, 1]} : vector<2x128xf32> to vector<2x32xf32>
    %104 = vector.extract_strided_slice %99 {offsets = [0, 96], sizes = [2, 32], strides = [1, 1]} : vector<2x128xf32> to vector<2x32xf32>
    %105 = arith.mulf %103, %88 : vector<2x32xf32>
    %106 = arith.mulf %102, %101 : vector<2x32xf32>
    %107 = arith.addf %105, %106 : vector<2x32xf32>
    %108 = math.tanh %107 : vector<2x32xf32>
    %109 = arith.mulf %104, %108 : vector<2x32xf32>
    %c6_55 = arith.constant 6 : index
    %c0_56 = arith.constant 0 : index
    %110 = vector.load %arg14[%c6_55, %c0_56] : memref<16x32xf32, #tpu.memory_space<vmem>>, vector<2x32xf32>
    tpu.vector_store %arg14[%c6_55, %c0_56], %109 {strides = array<i32>} : memref<16x32xf32, #tpu.memory_space<vmem>>, vector<2x32xf32>,
    %cst_57 = arith.constant dense<0.000000e+00> : vector<2x128xf32>
    %111 = tpu.matmul %109, %32, %cst_57 {dimension_numbers = #tpu.dot_dimension_numbers<[1], [0], [0], [1], [0, 0, 1, 1], [], []>} : vector<2x32xf32>, vector<32x128xf32>, vector<2x128xf32> -> vector<2x128xf32>
    %c8 = arith.constant 8 : index
    %c0_58 = arith.constant 0 : index
    %112 = vector.load %arg15[%c8, %c0_58] : memref<16x128xf32, #tpu.memory_space<vmem>>, vector<2x128xf32>
    %113 = arith.addf %111, %112 : vector<2x128xf32>
    %114 = arith.negf %113 : vector<2x128xf32>
    %115 = math.exp %114 : vector<2x128xf32>
    %cst_59 = arith.constant 1.000000e+00 : f32
    %116 = vector.broadcast %cst_59 : f32 to vector<2x128xf32>
    %117 = arith.addf %116, %115 : vector<2x128xf32>
    %118 = arith.divf %116, %117 : vector<2x128xf32>
    %119 = vector.extract_strided_slice %113 {offsets = [0, 64], sizes = [2, 32], strides = [1, 1]} : vector<2x128xf32> to vector<2x32xf32>
    %120 = math.tanh %119 : vector<2x32xf32>
    %121 = vector.extract_strided_slice %118 {offsets = [0, 0], sizes = [2, 32], strides = [1, 1]} : vector<2x128xf32> to vector<2x32xf32>
    %122 = vector.extract_strided_slice %118 {offsets = [0, 32], sizes = [2, 32], strides = [1, 1]} : vector<2x128xf32> to vector<2x32xf32>
    %123 = vector.extract_strided_slice %118 {offsets = [0, 96], sizes = [2, 32], strides = [1, 1]} : vector<2x128xf32> to vector<2x32xf32>
    %124 = arith.mulf %122, %107 : vector<2x32xf32>
    %125 = arith.mulf %121, %120 : vector<2x32xf32>
    %126 = arith.addf %124, %125 : vector<2x32xf32>
    %127 = math.tanh %126 : vector<2x32xf32>
    %128 = arith.mulf %123, %127 : vector<2x32xf32>
    %c8_60 = arith.constant 8 : index
    %c0_61 = arith.constant 0 : index
    %129 = vector.load %arg14[%c8_60, %c0_61] : memref<16x32xf32, #tpu.memory_space<vmem>>, vector<2x32xf32>
    tpu.vector_store %arg14[%c8_60, %c0_61], %128 {strides = array<i32>} : memref<16x32xf32, #tpu.memory_space<vmem>>, vector<2x32xf32>,
    %cst_62 = arith.constant dense<0.000000e+00> : vector<2x128xf32>
    %130 = tpu.matmul %128, %32, %cst_62 {dimension_numbers = #tpu.dot_dimension_numbers<[1], [0], [0], [1], [0, 0, 1, 1], [], []>} : vector<2x32xf32>, vector<32x128xf32>, vector<2x128xf32> -> vector<2x128xf32>
    %c10 = arith.constant 10 : index
    %c0_63 = arith.constant 0 : index
    %131 = vector.load %arg15[%c10, %c0_63] : memref<16x128xf32, #tpu.memory_space<vmem>>, vector<2x128xf32>
    %132 = arith.addf %130, %131 : vector<2x128xf32>
    %133 = arith.negf %132 : vector<2x128xf32>
    %134 = math.exp %133 : vector<2x128xf32>
    %cst_64 = arith.constant 1.000000e+00 : f32
    %135 = vector.broadcast %cst_64 : f32 to vector<2x128xf32>
    %136 = arith.addf %135, %134 : vector<2x128xf32>
    %137 = arith.divf %135, %136 : vector<2x128xf32>
    %138 = vector.extract_strided_slice %132 {offsets = [0, 64], sizes = [2, 32], strides = [1, 1]} : vector<2x128xf32> to vector<2x32xf32>
    %139 = math.tanh %138 : vector<2x32xf32>
    %140 = vector.extract_strided_slice %137 {offsets = [0, 0], sizes = [2, 32], strides = [1, 1]} : vector<2x128xf32> to vector<2x32xf32>
    %141 = vector.extract_strided_slice %137 {offsets = [0, 32], sizes = [2, 32], strides = [1, 1]} : vector<2x128xf32> to vector<2x32xf32>
    %142 = vector.extract_strided_slice %137 {offsets = [0, 96], sizes = [2, 32], strides = [1, 1]} : vector<2x128xf32> to vector<2x32xf32>
    %143 = arith.mulf %141, %126 : vector<2x32xf32>
    %144 = arith.mulf %140, %139 : vector<2x32xf32>
    %145 = arith.addf %143, %144 : vector<2x32xf32>
    %146 = math.tanh %145 : vector<2x32xf32>
    %147 = arith.mulf %142, %146 : vector<2x32xf32>
    %c10_65 = arith.constant 10 : index
    %c0_66 = arith.constant 0 : index
    %148 = vector.load %arg14[%c10_65, %c0_66] : memref<16x32xf32, #tpu.memory_space<vmem>>, vector<2x32xf32>
    tpu.vector_store %arg14[%c10_65, %c0_66], %147 {strides = array<i32>} : memref<16x32xf32, #tpu.memory_space<vmem>>, vector<2x32xf32>,
    %cst_67 = arith.constant dense<0.000000e+00> : vector<2x128xf32>
    %149 = tpu.matmul %147, %32, %cst_67 {dimension_numbers = #tpu.dot_dimension_numbers<[1], [0], [0], [1], [0, 0, 1, 1], [], []>} : vector<2x32xf32>, vector<32x128xf32>, vector<2x128xf32> -> vector<2x128xf32>
    %c12 = arith.constant 12 : index
    %c0_68 = arith.constant 0 : index
    %150 = vector.load %arg15[%c12, %c0_68] : memref<16x128xf32, #tpu.memory_space<vmem>>, vector<2x128xf32>
    %151 = arith.addf %149, %150 : vector<2x128xf32>
    %152 = arith.negf %151 : vector<2x128xf32>
    %153 = math.exp %152 : vector<2x128xf32>
    %cst_69 = arith.constant 1.000000e+00 : f32
    %154 = vector.broadcast %cst_69 : f32 to vector<2x128xf32>
    %155 = arith.addf %154, %153 : vector<2x128xf32>
    %156 = arith.divf %154, %155 : vector<2x128xf32>
    %157 = vector.extract_strided_slice %151 {offsets = [0, 64], sizes = [2, 32], strides = [1, 1]} : vector<2x128xf32> to vector<2x32xf32>
    %158 = math.tanh %157 : vector<2x32xf32>
    %159 = vector.extract_strided_slice %156 {offsets = [0, 0], sizes = [2, 32], strides = [1, 1]} : vector<2x128xf32> to vector<2x32xf32>
    %160 = vector.extract_strided_slice %156 {offsets = [0, 32], sizes = [2, 32], strides = [1, 1]} : vector<2x128xf32> to vector<2x32xf32>
    %161 = vector.extract_strided_slice %156 {offsets = [0, 96], sizes = [2, 32], strides = [1, 1]} : vector<2x128xf32> to vector<2x32xf32>
    %162 = arith.mulf %160, %145 : vector<2x32xf32>
    %163 = arith.mulf %159, %158 : vector<2x32xf32>
    %164 = arith.addf %162, %163 : vector<2x32xf32>
    %165 = math.tanh %164 : vector<2x32xf32>
    %166 = arith.mulf %161, %165 : vector<2x32xf32>
    %c12_70 = arith.constant 12 : index
    %c0_71 = arith.constant 0 : index
    %167 = vector.load %arg14[%c12_70, %c0_71] : memref<16x32xf32, #tpu.memory_space<vmem>>, vector<2x32xf32>
    tpu.vector_store %arg14[%c12_70, %c0_71], %166 {strides = array<i32>} : memref<16x32xf32, #tpu.memory_space<vmem>>, vector<2x32xf32>,
    %cst_72 = arith.constant dense<0.000000e+00> : vector<2x128xf32>
    %168 = tpu.matmul %166, %32, %cst_72 {dimension_numbers = #tpu.dot_dimension_numbers<[1], [0], [0], [1], [0, 0, 1, 1], [], []>} : vector<2x32xf32>, vector<32x128xf32>, vector<2x128xf32> -> vector<2x128xf32>
    %c14 = arith.constant 14 : index
    %c0_73 = arith.constant 0 : index
    %169 = vector.load %arg15[%c14, %c0_73] : memref<16x128xf32, #tpu.memory_space<vmem>>, vector<2x128xf32>
    %170 = arith.addf %168, %169 : vector<2x128xf32>
    %171 = arith.negf %170 : vector<2x128xf32>
    %172 = math.exp %171 : vector<2x128xf32>
    %cst_74 = arith.constant 1.000000e+00 : f32
    %173 = vector.broadcast %cst_74 : f32 to vector<2x128xf32>
    %174 = arith.addf %173, %172 : vector<2x128xf32>
    %175 = arith.divf %173, %174 : vector<2x128xf32>
    %176 = vector.extract_strided_slice %170 {offsets = [0, 64], sizes = [2, 32], strides = [1, 1]} : vector<2x128xf32> to vector<2x32xf32>
    %177 = math.tanh %176 : vector<2x32xf32>
    %178 = vector.extract_strided_slice %175 {offsets = [0, 0], sizes = [2, 32], strides = [1, 1]} : vector<2x128xf32> to vector<2x32xf32>
    %179 = vector.extract_strided_slice %175 {offsets = [0, 32], sizes = [2, 32], strides = [1, 1]} : vector<2x128xf32> to vector<2x32xf32>
    %180 = vector.extract_strided_slice %175 {offsets = [0, 96], sizes = [2, 32], strides = [1, 1]} : vector<2x128xf32> to vector<2x32xf32>
    %181 = arith.mulf %179, %164 : vector<2x32xf32>
    %182 = arith.mulf %178, %177 : vector<2x32xf32>
    %183 = arith.addf %181, %182 : vector<2x32xf32>
    %184 = math.tanh %183 : vector<2x32xf32>
    %185 = arith.mulf %180, %184 : vector<2x32xf32>
    %c14_75 = arith.constant 14 : index
    %c0_76 = arith.constant 0 : index
    %186 = vector.load %arg14[%c14_75, %c0_76] : memref<16x32xf32, #tpu.memory_space<vmem>>, vector<2x32xf32>
    tpu.vector_store %arg14[%c14_75, %c0_76], %185 {strides = array<i32>} : memref<16x32xf32, #tpu.memory_space<vmem>>, vector<2x32xf32>,
    %c0_77 = arith.constant 0 : index
    %c0_78 = arith.constant 0 : index
    %187 = vector.load %arg14[%c0_77, %c0_78] : memref<16x32xf32, #tpu.memory_space<vmem>>, vector<16x32xf32>
    %c1 = arith.constant 1 : index
    %c0_79 = arith.constant 0 : index
    %c0_80 = arith.constant 0 : index
    %188 = vector.load %arg7[%c1, %c0_79, %c0_80] : memref<2x32x128xf32, #tpu.memory_space<vmem>>, vector<1x32x128xf32>
    %189 = vector.shape_cast %188 : vector<1x32x128xf32> to vector<32x128xf32>
    %cst_81 = arith.constant dense<0.000000e+00> : vector<16x128xf32>
    %190 = tpu.matmul %187, %189, %cst_81 {dimension_numbers = #tpu.dot_dimension_numbers<[1], [0], [0], [1], [0, 0, 1, 1], [], []>} : vector<16x32xf32>, vector<32x128xf32>, vector<16x128xf32> -> vector<16x128xf32>
    %c1_82 = arith.constant 1 : index
    %c0_83 = arith.constant 0 : index
    %c0_84 = arith.constant 0 : index
    %191 = vector.load %arg9[%c1_82, %c0_83, %c0_84] : memref<2x1x128xf32, #tpu.memory_space<vmem>>, vector<1x1x128xf32>
    %192 = vector.shape_cast %191 : vector<1x1x128xf32> to vector<1x128xf32>
    %193 = vector.broadcast %192 : vector<1x128xf32> to vector<16x128xf32>
    %194 = arith.addf %190, %193 : vector<16x128xf32>
    %c0_85 = arith.constant 0 : index
    %c0_86 = arith.constant 0 : index
    %195 = vector.load %arg15[%c0_85, %c0_86] : memref<16x128xf32, #tpu.memory_space<vmem>>, vector<16x128xf32>
    tpu.vector_store %arg15[%c0_85, %c0_86], %194 {strides = array<i32>} : memref<16x128xf32, #tpu.memory_space<vmem>>, vector<16x128xf32>,
    %c1_87 = arith.constant 1 : index
    %c0_88 = arith.constant 0 : index
    %c0_89 = arith.constant 0 : index
    %196 = vector.load %arg8[%c1_87, %c0_88, %c0_89] : memref<2x32x128xf32, #tpu.memory_space<vmem>>, vector<1x32x128xf32>
    %197 = vector.shape_cast %196 : vector<1x32x128xf32> to vector<32x128xf32>
    %cst_90 = arith.constant 0.000000e+00 : f32
    %198 = vector.broadcast %cst_90 : f32 to vector<2x32xf32>
    %cst_91 = arith.constant 0.000000e+00 : f32
    %199 = vector.broadcast %cst_91 : f32 to vector<2x32xf32>
    %cst_92 = arith.constant dense<0.000000e+00> : vector<2x128xf32>
    %200 = tpu.matmul %198, %197, %cst_92 {dimension_numbers = #tpu.dot_dimension_numbers<[1], [0], [0], [1], [0, 0, 1, 1], [], []>} : vector<2x32xf32>, vector<32x128xf32>, vector<2x128xf32> -> vector<2x128xf32>
    %c0_93 = arith.constant 0 : index
    %c0_94 = arith.constant 0 : index
    %201 = vector.load %arg15[%c0_93, %c0_94] : memref<16x128xf32, #tpu.memory_space<vmem>>, vector<2x128xf32>
    %202 = arith.addf %200, %201 : vector<2x128xf32>
    %203 = arith.negf %202 : vector<2x128xf32>
    %204 = math.exp %203 : vector<2x128xf32>
    %cst_95 = arith.constant 1.000000e+00 : f32
    %205 = vector.broadcast %cst_95 : f32 to vector<2x128xf32>
    %206 = arith.addf %205, %204 : vector<2x128xf32>
    %207 = arith.divf %205, %206 : vector<2x128xf32>
    %208 = vector.extract_strided_slice %202 {offsets = [0, 64], sizes = [2, 32], strides = [1, 1]} : vector<2x128xf32> to vector<2x32xf32>
    %209 = math.tanh %208 : vector<2x32xf32>
    %210 = vector.extract_strided_slice %207 {offsets = [0, 0], sizes = [2, 32], strides = [1, 1]} : vector<2x128xf32> to vector<2x32xf32>
    %211 = vector.extract_strided_slice %207 {offsets = [0, 32], sizes = [2, 32], strides = [1, 1]} : vector<2x128xf32> to vector<2x32xf32>
    %212 = vector.extract_strided_slice %207 {offsets = [0, 96], sizes = [2, 32], strides = [1, 1]} : vector<2x128xf32> to vector<2x32xf32>
    %213 = arith.mulf %211, %199 : vector<2x32xf32>
    %214 = arith.mulf %210, %209 : vector<2x32xf32>
    %215 = arith.addf %213, %214 : vector<2x32xf32>
    %216 = math.tanh %215 : vector<2x32xf32>
    %217 = arith.mulf %212, %216 : vector<2x32xf32>
    %cst_96 = arith.constant dense<0.000000e+00> : vector<2x128xf32>
    %218 = tpu.matmul %217, %197, %cst_96 {dimension_numbers = #tpu.dot_dimension_numbers<[1], [0], [0], [1], [0, 0, 1, 1], [], []>} : vector<2x32xf32>, vector<32x128xf32>, vector<2x128xf32> -> vector<2x128xf32>
    %c2_97 = arith.constant 2 : index
    %c0_98 = arith.constant 0 : index
    %219 = vector.load %arg15[%c2_97, %c0_98] : memref<16x128xf32, #tpu.memory_space<vmem>>, vector<2x128xf32>
    %220 = arith.addf %218, %219 : vector<2x128xf32>
    %221 = arith.negf %220 : vector<2x128xf32>
    %222 = math.exp %221 : vector<2x128xf32>
    %cst_99 = arith.constant 1.000000e+00 : f32
    %223 = vector.broadcast %cst_99 : f32 to vector<2x128xf32>
    %224 = arith.addf %223, %222 : vector<2x128xf32>
    %225 = arith.divf %223, %224 : vector<2x128xf32>
    %226 = vector.extract_strided_slice %220 {offsets = [0, 64], sizes = [2, 32], strides = [1, 1]} : vector<2x128xf32> to vector<2x32xf32>
    %227 = math.tanh %226 : vector<2x32xf32>
    %228 = vector.extract_strided_slice %225 {offsets = [0, 0], sizes = [2, 32], strides = [1, 1]} : vector<2x128xf32> to vector<2x32xf32>
    %229 = vector.extract_strided_slice %225 {offsets = [0, 32], sizes = [2, 32], strides = [1, 1]} : vector<2x128xf32> to vector<2x32xf32>
    %230 = vector.extract_strided_slice %225 {offsets = [0, 96], sizes = [2, 32], strides = [1, 1]} : vector<2x128xf32> to vector<2x32xf32>
    %231 = arith.mulf %229, %215 : vector<2x32xf32>
    %232 = arith.mulf %228, %227 : vector<2x32xf32>
    %233 = arith.addf %231, %232 : vector<2x32xf32>
    %234 = math.tanh %233 : vector<2x32xf32>
    %235 = arith.mulf %230, %234 : vector<2x32xf32>
    %cst_100 = arith.constant dense<0.000000e+00> : vector<2x128xf32>
    %236 = tpu.matmul %235, %197, %cst_100 {dimension_numbers = #tpu.dot_dimension_numbers<[1], [0], [0], [1], [0, 0, 1, 1], [], []>} : vector<2x32xf32>, vector<32x128xf32>, vector<2x128xf32> -> vector<2x128xf32>
    %c4_101 = arith.constant 4 : index
    %c0_102 = arith.constant 0 : index
    %237 = vector.load %arg15[%c4_101, %c0_102] : memref<16x128xf32, #tpu.memory_space<vmem>>, vector<2x128xf32>
    %238 = arith.addf %236, %237 : vector<2x128xf32>
    %239 = arith.negf %238 : vector<2x128xf32>
    %240 = math.exp %239 : vector<2x128xf32>
    %cst_103 = arith.constant 1.000000e+00 : f32
    %241 = vector.broadcast %cst_103 : f32 to vector<2x128xf32>
    %242 = arith.addf %241, %240 : vector<2x128xf32>
    %243 = arith.divf %241, %242 : vector<2x128xf32>
    %244 = vector.extract_strided_slice %238 {offsets = [0, 64], sizes = [2, 32], strides = [1, 1]} : vector<2x128xf32> to vector<2x32xf32>
    %245 = math.tanh %244 : vector<2x32xf32>
    %246 = vector.extract_strided_slice %243 {offsets = [0, 0], sizes = [2, 32], strides = [1, 1]} : vector<2x128xf32> to vector<2x32xf32>
    %247 = vector.extract_strided_slice %243 {offsets = [0, 32], sizes = [2, 32], strides = [1, 1]} : vector<2x128xf32> to vector<2x32xf32>
    %248 = vector.extract_strided_slice %243 {offsets = [0, 96], sizes = [2, 32], strides = [1, 1]} : vector<2x128xf32> to vector<2x32xf32>
    %249 = arith.mulf %247, %233 : vector<2x32xf32>
    %250 = arith.mulf %246, %245 : vector<2x32xf32>
    %251 = arith.addf %249, %250 : vector<2x32xf32>
    %252 = math.tanh %251 : vector<2x32xf32>
    %253 = arith.mulf %248, %252 : vector<2x32xf32>
    %cst_104 = arith.constant dense<0.000000e+00> : vector<2x128xf32>
    %254 = tpu.matmul %253, %197, %cst_104 {dimension_numbers = #tpu.dot_dimension_numbers<[1], [0], [0], [1], [0, 0, 1, 1], [], []>} : vector<2x32xf32>, vector<32x128xf32>, vector<2x128xf32> -> vector<2x128xf32>
    %c6_105 = arith.constant 6 : index
    %c0_106 = arith.constant 0 : index
    %255 = vector.load %arg15[%c6_105, %c0_106] : memref<16x128xf32, #tpu.memory_space<vmem>>, vector<2x128xf32>
    %256 = arith.addf %254, %255 : vector<2x128xf32>
    %257 = arith.negf %256 : vector<2x128xf32>
    %258 = math.exp %257 : vector<2x128xf32>
    %cst_107 = arith.constant 1.000000e+00 : f32
    %259 = vector.broadcast %cst_107 : f32 to vector<2x128xf32>
    %260 = arith.addf %259, %258 : vector<2x128xf32>
    %261 = arith.divf %259, %260 : vector<2x128xf32>
    %262 = vector.extract_strided_slice %256 {offsets = [0, 64], sizes = [2, 32], strides = [1, 1]} : vector<2x128xf32> to vector<2x32xf32>
    %263 = math.tanh %262 : vector<2x32xf32>
    %264 = vector.extract_strided_slice %261 {offsets = [0, 0], sizes = [2, 32], strides = [1, 1]} : vector<2x128xf32> to vector<2x32xf32>
    %265 = vector.extract_strided_slice %261 {offsets = [0, 32], sizes = [2, 32], strides = [1, 1]} : vector<2x128xf32> to vector<2x32xf32>
    %266 = vector.extract_strided_slice %261 {offsets = [0, 96], sizes = [2, 32], strides = [1, 1]} : vector<2x128xf32> to vector<2x32xf32>
    %267 = arith.mulf %265, %251 : vector<2x32xf32>
    %268 = arith.mulf %264, %263 : vector<2x32xf32>
    %269 = arith.addf %267, %268 : vector<2x32xf32>
    %270 = math.tanh %269 : vector<2x32xf32>
    %271 = arith.mulf %266, %270 : vector<2x32xf32>
    %cst_108 = arith.constant dense<0.000000e+00> : vector<2x128xf32>
    %272 = tpu.matmul %271, %197, %cst_108 {dimension_numbers = #tpu.dot_dimension_numbers<[1], [0], [0], [1], [0, 0, 1, 1], [], []>} : vector<2x32xf32>, vector<32x128xf32>, vector<2x128xf32> -> vector<2x128xf32>
    %c8_109 = arith.constant 8 : index
    %c0_110 = arith.constant 0 : index
    %273 = vector.load %arg15[%c8_109, %c0_110] : memref<16x128xf32, #tpu.memory_space<vmem>>, vector<2x128xf32>
    %274 = arith.addf %272, %273 : vector<2x128xf32>
    %275 = arith.negf %274 : vector<2x128xf32>
    %276 = math.exp %275 : vector<2x128xf32>
    %cst_111 = arith.constant 1.000000e+00 : f32
    %277 = vector.broadcast %cst_111 : f32 to vector<2x128xf32>
    %278 = arith.addf %277, %276 : vector<2x128xf32>
    %279 = arith.divf %277, %278 : vector<2x128xf32>
    %280 = vector.extract_strided_slice %274 {offsets = [0, 64], sizes = [2, 32], strides = [1, 1]} : vector<2x128xf32> to vector<2x32xf32>
    %281 = math.tanh %280 : vector<2x32xf32>
    %282 = vector.extract_strided_slice %279 {offsets = [0, 0], sizes = [2, 32], strides = [1, 1]} : vector<2x128xf32> to vector<2x32xf32>
    %283 = vector.extract_strided_slice %279 {offsets = [0, 32], sizes = [2, 32], strides = [1, 1]} : vector<2x128xf32> to vector<2x32xf32>
    %284 = vector.extract_strided_slice %279 {offsets = [0, 96], sizes = [2, 32], strides = [1, 1]} : vector<2x128xf32> to vector<2x32xf32>
    %285 = arith.mulf %283, %269 : vector<2x32xf32>
    %286 = arith.mulf %282, %281 : vector<2x32xf32>
    %287 = arith.addf %285, %286 : vector<2x32xf32>
    %288 = math.tanh %287 : vector<2x32xf32>
    %289 = arith.mulf %284, %288 : vector<2x32xf32>
    %cst_112 = arith.constant dense<0.000000e+00> : vector<2x128xf32>
    %290 = tpu.matmul %289, %197, %cst_112 {dimension_numbers = #tpu.dot_dimension_numbers<[1], [0], [0], [1], [0, 0, 1, 1], [], []>} : vector<2x32xf32>, vector<32x128xf32>, vector<2x128xf32> -> vector<2x128xf32>
    %c10_113 = arith.constant 10 : index
    %c0_114 = arith.constant 0 : index
    %291 = vector.load %arg15[%c10_113, %c0_114] : memref<16x128xf32, #tpu.memory_space<vmem>>, vector<2x128xf32>
    %292 = arith.addf %290, %291 : vector<2x128xf32>
    %293 = arith.negf %292 : vector<2x128xf32>
    %294 = math.exp %293 : vector<2x128xf32>
    %cst_115 = arith.constant 1.000000e+00 : f32
    %295 = vector.broadcast %cst_115 : f32 to vector<2x128xf32>
    %296 = arith.addf %295, %294 : vector<2x128xf32>
    %297 = arith.divf %295, %296 : vector<2x128xf32>
    %298 = vector.extract_strided_slice %292 {offsets = [0, 64], sizes = [2, 32], strides = [1, 1]} : vector<2x128xf32> to vector<2x32xf32>
    %299 = math.tanh %298 : vector<2x32xf32>
    %300 = vector.extract_strided_slice %297 {offsets = [0, 0], sizes = [2, 32], strides = [1, 1]} : vector<2x128xf32> to vector<2x32xf32>
    %301 = vector.extract_strided_slice %297 {offsets = [0, 32], sizes = [2, 32], strides = [1, 1]} : vector<2x128xf32> to vector<2x32xf32>
    %302 = vector.extract_strided_slice %297 {offsets = [0, 96], sizes = [2, 32], strides = [1, 1]} : vector<2x128xf32> to vector<2x32xf32>
    %303 = arith.mulf %301, %287 : vector<2x32xf32>
    %304 = arith.mulf %300, %299 : vector<2x32xf32>
    %305 = arith.addf %303, %304 : vector<2x32xf32>
    %306 = math.tanh %305 : vector<2x32xf32>
    %307 = arith.mulf %302, %306 : vector<2x32xf32>
    %cst_116 = arith.constant dense<0.000000e+00> : vector<2x128xf32>
    %308 = tpu.matmul %307, %197, %cst_116 {dimension_numbers = #tpu.dot_dimension_numbers<[1], [0], [0], [1], [0, 0, 1, 1], [], []>} : vector<2x32xf32>, vector<32x128xf32>, vector<2x128xf32> -> vector<2x128xf32>
    %c12_117 = arith.constant 12 : index
    %c0_118 = arith.constant 0 : index
    %309 = vector.load %arg15[%c12_117, %c0_118] : memref<16x128xf32, #tpu.memory_space<vmem>>, vector<2x128xf32>
    %310 = arith.addf %308, %309 : vector<2x128xf32>
    %311 = arith.negf %310 : vector<2x128xf32>
    %312 = math.exp %311 : vector<2x128xf32>
    %cst_119 = arith.constant 1.000000e+00 : f32
    %313 = vector.broadcast %cst_119 : f32 to vector<2x128xf32>
    %314 = arith.addf %313, %312 : vector<2x128xf32>
    %315 = arith.divf %313, %314 : vector<2x128xf32>
    %316 = vector.extract_strided_slice %310 {offsets = [0, 64], sizes = [2, 32], strides = [1, 1]} : vector<2x128xf32> to vector<2x32xf32>
    %317 = math.tanh %316 : vector<2x32xf32>
    %318 = vector.extract_strided_slice %315 {offsets = [0, 0], sizes = [2, 32], strides = [1, 1]} : vector<2x128xf32> to vector<2x32xf32>
    %319 = vector.extract_strided_slice %315 {offsets = [0, 32], sizes = [2, 32], strides = [1, 1]} : vector<2x128xf32> to vector<2x32xf32>
    %320 = vector.extract_strided_slice %315 {offsets = [0, 96], sizes = [2, 32], strides = [1, 1]} : vector<2x128xf32> to vector<2x32xf32>
    %321 = arith.mulf %319, %305 : vector<2x32xf32>
    %322 = arith.mulf %318, %317 : vector<2x32xf32>
    %323 = arith.addf %321, %322 : vector<2x32xf32>
    %324 = math.tanh %323 : vector<2x32xf32>
    %325 = arith.mulf %320, %324 : vector<2x32xf32>
    %c0_120 = arith.constant 0 : index
    %c0_121 = arith.constant 0 : index
    %326 = vector.load %arg10[%c0_120, %c0_121] : memref<1x32xf32, #tpu.memory_space<vmem>>, vector<1x32xf32>
    %327 = vector.broadcast %326 : vector<1x32xf32> to vector<2x32xf32>
    %328 = arith.mulf %325, %327 : vector<2x32xf32>
    %cst_122 = arith.constant dense<0.000000e+00> : vector<2xf32>
    %329 = vector.multi_reduction <add>, %328, %cst_122 [1] : vector<2x32xf32> to vector<2xf32>
    %330 = vector.shape_cast %329 : vector<2xf32> to vector<2x1xf32>
    %331 = arith.addf %330, %12 : vector<2x1xf32>
    %c0_123 = arith.constant 0 : index
    %c0_124 = arith.constant 0 : index
    %332 = vector.load %arg12[%c0_123, %c0_124] : memref<1x1xf32, #tpu.memory_space<vmem>>, vector<1x1xf32>
    %333 = vector.broadcast %332 : vector<1x1xf32> to vector<2x1xf32>
    %334 = arith.addf %331, %333 : vector<2x1xf32>
    %cst_125 = arith.constant 2.000000e+01 : f32
    %335 = vector.broadcast %cst_125 : f32 to vector<2x1xf32>
    %336 = arith.cmpf ogt, %334, %335 : vector<2x1xf32>
    %cst_126 = arith.constant 2.000000e+01 : f32
    %337 = vector.broadcast %cst_126 : f32 to vector<2x1xf32>
    %338 = arith.minimumf %334, %337 : vector<2x1xf32>
    %339 = math.exp %338 : vector<2x1xf32>
    %340 = math.log1p %339 : vector<2x1xf32>
    %341 = arith.select %336, %334, %340 : vector<2x1xi1>, vector<2x1xf32>
    %c0_127 = arith.constant 0 : index
    %c0_128 = arith.constant 0 : index
    %342 = vector.load %arg13[%c0_127, %c0_128] : memref<2x2xf32, #tpu.memory_space<vmem>>, vector<2x1xf32>
    tpu.vector_store %arg13[%c0_127, %c0_128], %341 {strides = array<i32>} : memref<2x2xf32, #tpu.memory_space<vmem>>, vector<2x1xf32>,
    %cst_129 = arith.constant dense<0.000000e+00> : vector<2x128xf32>
    %343 = tpu.matmul %325, %197, %cst_129 {dimension_numbers = #tpu.dot_dimension_numbers<[1], [0], [0], [1], [0, 0, 1, 1], [], []>} : vector<2x32xf32>, vector<32x128xf32>, vector<2x128xf32> -> vector<2x128xf32>
    %c14_130 = arith.constant 14 : index
    %c0_131 = arith.constant 0 : index
    %344 = vector.load %arg15[%c14_130, %c0_131] : memref<16x128xf32, #tpu.memory_space<vmem>>, vector<2x128xf32>
    %345 = arith.addf %343, %344 : vector<2x128xf32>
    %346 = arith.negf %345 : vector<2x128xf32>
    %347 = math.exp %346 : vector<2x128xf32>
    %cst_132 = arith.constant 1.000000e+00 : f32
    %348 = vector.broadcast %cst_132 : f32 to vector<2x128xf32>
    %349 = arith.addf %348, %347 : vector<2x128xf32>
    %350 = arith.divf %348, %349 : vector<2x128xf32>
    %351 = vector.extract_strided_slice %345 {offsets = [0, 64], sizes = [2, 32], strides = [1, 1]} : vector<2x128xf32> to vector<2x32xf32>
    %352 = math.tanh %351 : vector<2x32xf32>
    %353 = vector.extract_strided_slice %350 {offsets = [0, 0], sizes = [2, 32], strides = [1, 1]} : vector<2x128xf32> to vector<2x32xf32>
    %354 = vector.extract_strided_slice %350 {offsets = [0, 32], sizes = [2, 32], strides = [1, 1]} : vector<2x128xf32> to vector<2x32xf32>
    %355 = vector.extract_strided_slice %350 {offsets = [0, 96], sizes = [2, 32], strides = [1, 1]} : vector<2x128xf32> to vector<2x32xf32>
    %356 = arith.mulf %354, %323 : vector<2x32xf32>
    %357 = arith.mulf %353, %352 : vector<2x32xf32>
    %358 = arith.addf %356, %357 : vector<2x32xf32>
    %359 = math.tanh %358 : vector<2x32xf32>
    %360 = arith.mulf %355, %359 : vector<2x32xf32>
    %c0_133 = arith.constant 0 : index
    %c0_134 = arith.constant 0 : index
    %361 = vector.load %arg10[%c0_133, %c0_134] : memref<1x32xf32, #tpu.memory_space<vmem>>, vector<1x32xf32>
    %362 = vector.broadcast %361 : vector<1x32xf32> to vector<2x32xf32>
    %363 = arith.mulf %360, %362 : vector<2x32xf32>
    %cst_135 = arith.constant dense<0.000000e+00> : vector<2xf32>
    %364 = vector.multi_reduction <add>, %363, %cst_135 [1] : vector<2x32xf32> to vector<2xf32>
    %365 = vector.shape_cast %364 : vector<2xf32> to vector<2x1xf32>
    %366 = arith.addf %365, %12 : vector<2x1xf32>
    %c0_136 = arith.constant 0 : index
    %c0_137 = arith.constant 0 : index
    %367 = vector.load %arg12[%c0_136, %c0_137] : memref<1x1xf32, #tpu.memory_space<vmem>>, vector<1x1xf32>
    %368 = vector.broadcast %367 : vector<1x1xf32> to vector<2x1xf32>
    %369 = arith.addf %366, %368 : vector<2x1xf32>
    %cst_138 = arith.constant 2.000000e+01 : f32
    %370 = vector.broadcast %cst_138 : f32 to vector<2x1xf32>
    %371 = arith.cmpf ogt, %369, %370 : vector<2x1xf32>
    %cst_139 = arith.constant 2.000000e+01 : f32
    %372 = vector.broadcast %cst_139 : f32 to vector<2x1xf32>
    %373 = arith.minimumf %369, %372 : vector<2x1xf32>
    %374 = math.exp %373 : vector<2x1xf32>
    %375 = math.log1p %374 : vector<2x1xf32>
    %376 = arith.select %371, %369, %375 : vector<2x1xi1>, vector<2x1xf32>
    %c0_140 = arith.constant 0 : index
    %c1_141 = arith.constant 1 : index
    %377 = vector.load %arg13[%c0_140, %c1_141] : memref<2x2xf32, #tpu.memory_space<vmem>>, vector<2x1xf32>
    tpu.vector_store %arg13[%c0_140, %c1_141], %376 {strides = array<i32>} : memref<2x2xf32, #tpu.memory_space<vmem>>, vector<2x1xf32>,
    return
  }
}

</mosaic_0001>

<llo_original>
// kernel: tpu_custom_call.1
$region0: #{tpu_custom_call.1}
  #allocation0 [shape = 'u32[]', space=smem, size = 0x4, offset = 0x4, fixed_abs, tag = 'smem constant byte address 0x4 - core index']
  #allocation1 [shape = 'u32[144,128]{1,0:T(1,128)}', space=vmem, size = 0x12000, scoped, tag = 'internal scratch']
  #allocation2 [shape = 'f32[16,32]{1,0:T(8,128)}', space=vmem, size = 0x2000, scoped, tag = 'scratch operand']
  #allocation3 [shape = 'f32[16,128]{1,0:T(8,128)}', space=vmem, size = 0x2000, scoped, tag = 'scratch operand']
  #allocation4 [shape = 'f32[1,1]{1,0:T(1,128)S(1)}', space=vmem, size = 0x200, scoped, tag = 'scoped memory for tpu_custom_call.1']
  %s0 = inlined_call_operand.vmem [shape: f32[2,4], index: 0, kind: input, shape index: {}]
  %s1 = inlined_call_operand.hbm [shape: f32[16,9], index: 1, kind: input, shape index: {}]
  %s2 = inlined_call_operand.hbm [shape: f32[16,32], index: 2, kind: input, shape index: {}]
  %s3 = inlined_call_operand.vmem [shape: f32[4,16], index: 3, kind: input, shape index: {}]
  %s4 = inlined_call_operand.hbm [shape: f32[1,16], index: 4, kind: input, shape index: {}]
  %s5 = inlined_call_operand.vmem [shape: f32[9,32], index: 5, kind: input, shape index: {}]
  %s6 = inlined_call_operand.vmem [shape: f32[1,32], index: 6, kind: input, shape index: {}]
  %s7 = inlined_call_operand.hbm [shape: f32[2,32,128], index: 7, kind: input, shape index: {}]
  %s8 = inlined_call_operand.hbm [shape: f32[2,32,128], index: 8, kind: input, shape index: {}]
  %s9 = inlined_call_operand.vmem [shape: f32[2,1,128], index: 9, kind: input, shape index: {}]
  %s10 = inlined_call_operand.vmem [shape: f32[1,32], index: 10, kind: input, shape index: {}]
  %s11 = inlined_call_operand.vmem [shape: f32[1,16], index: 11, kind: input, shape index: {}]
  %s12 = inlined_call_operand.<no memory space> [shape: f32[1,1], index: 12, kind: input, shape index: {}]
  %s13 = inlined_call_operand.hbm [shape: f32[2,2], index: 13, kind: output, shape index: {}]
  %s14 = sld [smem:[#allocation0]]
  $region82: #{tpu_custom_call.1} parent=0
    _
  %s16 = ssub.s32 1, %s14
  %s17 = scalar_select 0, %s16, %s14
  %v18 = vstv %s12
  %19 = vst [vmem:[#allocation4] sm:$0x1] %v18
  $region1: #{tpu_custom_call.1} parent=0
    #allocation5 [shape = 'u8[8192]{0}', space=vmem, size = 0x2000, scoped, tag = 'input window, operand 1, single buffered']
    #allocation6 [shape = 's32[1]{0}', space=sflag, size = 0x4, scoped, tag = 'scoped memory for tpu_custom_call.1']
    #allocation7 [shape = 's32[1]{0}', space=sflag, size = 0x4, scoped, tag = 'scoped memory for tpu_custom_call.1']
    #allocation8 [shape = 'u8[8192]{0}', space=vmem, size = 0x2000, scoped, tag = 'input window, operand 2, single buffered']
    #allocation9 [shape = 's32[1]{0}', space=sflag, size = 0x4, scoped, tag = 'scoped memory for tpu_custom_call.1']
    #allocation10 [shape = 'u8[512]{0}', space=vmem, size = 0x400, scoped, tag = 'input window, operand 4, single buffered']
    #allocation11 [shape = 'u8[32768]{0}', space=vmem, size = 0x8000, scoped, tag = 'input window, operand 7, single buffered']
    #allocation12 [shape = 's32[1]{0}', space=sflag, size = 0x4, scoped, tag = 'scoped memory for tpu_custom_call.1']
    #allocation13 [shape = 'u8[32768]{0}', space=vmem, size = 0x8000, scoped, tag = 'input window, operand 8, single buffered']
    #allocation14 [shape = 'u8[1024]{0}', space=vmem, size = 0x400, scoped, tag = 'output window, operand 0, single buffered']
    %20 = vsyncpa [#allocation6], 0
    %21 = vsyncpa [#allocation9], 0
    %22 = vsyncpa [#allocation12], 0
    %23 = vsyncpa [#allocation7], 0
    // Predicated region
    $region2: #{tpu_custom_call.1} parent=1 // pred_check
      _
    $region3: #{tpu_custom_call.1} parent=1 // pred_check_branch
      %25 = sbr.rel (0) target = $region5
    $region4: #{tpu_custom_call.1} parent=1 // pred_region
      _
    $region5: #{tpu_custom_call.1} parent=1 // pred_fallthru
      _
    // Predicated region
    $region6: #{tpu_custom_call.1} parent=1 // pred_check
      _
    $region7: #{tpu_custom_call.1} parent=1 // pred_check_branch
      %27 = sbr.rel (0) target = $region9
    $region8: #{tpu_custom_call.1} parent=1 // pred_region
      %s29 = ssub.s32 256, 256
      %30 = vsyncadd [#allocation6], %s29
      %s31 = sshll.u32 [#allocation5], 4
      %s32 = int_to_ptr.vmem [resolvable:$true] %s31
      %37 = dma.hbm_to_vmem [thread:$0]  %s1, 256, %s32, [#allocation6], 128, 128, 8
    $region9: #{tpu_custom_call.1} parent=1 // pred_fallthru
      _
    // Predicated region
    $region10: #{tpu_custom_call.1} parent=1 // pred_check
      _
    $region11: #{tpu_custom_call.1} parent=1 // pred_check_branch
      %39 = sbr.rel (0) target = $region13
    $region12: #{tpu_custom_call.1} parent=1 // pred_region
      %s41 = ssub.s32 256, 256
      %42 = vsyncadd [#allocation9], %s41
      %s43 = sshll.u32 [#allocation8], 4
      %s44 = int_to_ptr.vmem [resolvable:$true] %s43
      %49 = dma.hbm_to_vmem [thread:$0]  %s2, 256, %s44, [#allocation9], 128, 128, 8
    $region13: #{tpu_custom_call.1} parent=1 // pred_fallthru
      _
    // Predicated region
    $region14: #{tpu_custom_call.1} parent=1 // pred_check
      _
    $region15: #{tpu_custom_call.1} parent=1 // pred_check_branch
      %51 = sbr.rel (0) target = $region17
    $region16: #{tpu_custom_call.1} parent=1 // pred_region
      _
    $region17: #{tpu_custom_call.1} parent=1 // pred_fallthru
      _
    // Predicated region
    $region18: #{tpu_custom_call.1} parent=1 // pred_check
      _
    $region19: #{tpu_custom_call.1} parent=1 // pred_check_branch
      %53 = sbr.rel (0) target = $region21
    $region20: #{tpu_custom_call.1} parent=1 // pred_region
      %s55 = ssub.s32 16, 16
      %56 = vsyncadd [#allocation9], %s55
      %s58 = sshll.u32 [#allocation10], 4
      %s59 = int_to_ptr.vmem [resolvable:$true] %s58
      %61 = dma.hbm_to_vmem [thread:$0]  %s4, 16, %s59, [#allocation9]
    $region21: #{tpu_custom_call.1} parent=1 // pred_fallthru
      _
    // Predicated region
    $region22: #{tpu_custom_call.1} parent=1 // pred_check
      _
    $region23: #{tpu_custom_call.1} parent=1 // pred_check_branch
      %63 = sbr.rel (0) target = $region25
    $region24: #{tpu_custom_call.1} parent=1 // pred_region
      _
    $region25: #{tpu_custom_call.1} parent=1 // pred_fallthru
      _
    // Predicated region
    $region26: #{tpu_custom_call.1} parent=1 // pred_check
      _
    $region27: #{tpu_custom_call.1} parent=1 // pred_check_branch
      %65 = sbr.rel (0) target = $region29
    $region28: #{tpu_custom_call.1} parent=1 // pred_region
      _
    $region29: #{tpu_custom_call.1} parent=1 // pred_fallthru
      _
    // Predicated region
    $region30: #{tpu_custom_call.1} parent=1 // pred_check
      _
    $region31: #{tpu_custom_call.1} parent=1 // pred_check_branch
      %67 = sbr.rel (0) target = $region33
    $region32: #{tpu_custom_call.1} parent=1 // pred_region
      %s69 = ssub.s32 1024, 1024
      %70 = vsyncadd [#allocation12], %s69
      %s71 = sshll.u32 [#allocation11], 4
      %s72 = int_to_ptr.vmem [resolvable:$true] %s71
      %77 = dma.hbm_to_vmem [thread:$0]  %s7, 1024, %s72, [#allocation12], 128, 128, 8
    $region33: #{tpu_custom_call.1} parent=1 // pred_fallthru
      _
    // Predicated region
    $region34: #{tpu_custom_call.1} parent=1 // pred_check
      _
    $region35: #{tpu_custom_call.1} parent=1 // pred_check_branch
      %79 = sbr.rel (0) target = $region37
    $region36: #{tpu_custom_call.1} parent=1 // pred_region
      %s81 = ssub.s32 1024, 1024
      %82 = vsyncadd [#allocation12], %s81
      %s83 = sshll.u32 [#allocation13], 4
      %s84 = int_to_ptr.vmem [resolvable:$true] %s83
      %89 = dma.hbm_to_vmem [thread:$0]  %s8, 1024, %s84, [#allocation12], 128, 128, 8
    $region37: #{tpu_custom_call.1} parent=1 // pred_fallthru
      _
    // Predicated region
    $region38: #{tpu_custom_call.1} parent=1 // pred_check
      _
    $region39: #{tpu_custom_call.1} parent=1 // pred_check_branch
      %91 = sbr.rel (0) target = $region41
    $region40: #{tpu_custom_call.1} parent=1 // pred_region
      _
    $region41: #{tpu_custom_call.1} parent=1 // pred_fallthru
      _
    // Predicated region
    $region42: #{tpu_custom_call.1} parent=1 // pred_check
      _
    $region43: #{tpu_custom_call.1} parent=1 // pred_check_branch
      %93 = sbr.rel (0) target = $region45
    $region44: #{tpu_custom_call.1} parent=1 // pred_region
      _
    $region45: #{tpu_custom_call.1} parent=1 // pred_fallthru
      _
    // Predicated region
    $region46: #{tpu_custom_call.1} parent=1 // pred_check
      _
    $region47: #{tpu_custom_call.1} parent=1 // pred_check_branch
      %95 = sbr.rel (0) target = $region49
    $region48: #{tpu_custom_call.1} parent=1 // pred_region
      _
    $region49: #{tpu_custom_call.1} parent=1 // pred_fallthru
      _
    // Predicated region
    $region50: #{tpu_custom_call.1} parent=1 // pred_check
      _
    $region51: #{tpu_custom_call.1} parent=1 // pred_check_branch
      %97 = sbr.rel (0) target = $region53
    $region52: #{tpu_custom_call.1} parent=1 // pred_region
      _
    $region53: #{tpu_custom_call.1} parent=1 // pred_fallthru
      _
    // Predicated region
    $region54: #{tpu_custom_call.1} parent=1 // pred_check
      _
    $region55: #{tpu_custom_call.1} parent=1 // pred_check_branch
      %99 = sbr.rel (0) target = $region57
    $region56: #{tpu_custom_call.1} parent=1 // pred_region
      %100 = dma.done [#allocation6], 256
    $region57: #{tpu_custom_call.1} parent=1 // pred_fallthru
      _
    // Predicated region
    $region58: #{tpu_custom_call.1} parent=1 // pred_check
      _
    $region59: #{tpu_custom_call.1} parent=1 // pred_check_branch
      %102 = sbr.rel (0) target = $region61
    $region60: #{tpu_custom_call.1} parent=1 // pred_region
      %103 = dma.done [#allocation9], 256
    $region61: #{tpu_custom_call.1} parent=1 // pred_fallthru
      _
    // Predicated region
    $region62: #{tpu_custom_call.1} parent=1 // pred_check
      _
    $region63: #{tpu_custom_call.1} parent=1 // pred_check_branch
      %105 = sbr.rel (0) target = $region65
    $region64: #{tpu_custom_call.1} parent=1 // pred_region
      %106 = dma.done [#allocation9], 16
    $region65: #{tpu_custom_call.1} parent=1 // pred_fallthru
      _
    // Predicated region
    $region66: #{tpu_custom_call.1} parent=1 // pred_check
      _
    $region67: #{tpu_custom_call.1} parent=1 // pred_check_branch
      %108 = sbr.rel (0) target = $region69
    $region68: #{tpu_custom_call.1} parent=1 // pred_region
      %109 = dma.done [#allocation12], 1024
    $region69: #{tpu_custom_call.1} parent=1 // pred_fallthru
      _
    // Predicated region
    $region70: #{tpu_custom_call.1} parent=1 // pred_check
      _
    $region71: #{tpu_custom_call.1} parent=1 // pred_check_branch
      %111 = sbr.rel (0) target = $region73
    $region72: #{tpu_custom_call.1} parent=1 // pred_region
      %112 = dma.done [#allocation12], 1024
    $region73: #{tpu_custom_call.1} parent=1 // pred_fallthru
      _
    %v113 = vld [vmem:[%s0] sm:$0x3]
    %v114 = vld [vmem:[%s3] sm:$0xf]
    %v115 = vld [vmem:[#allocation10] sm:$0x1]
    %v117 = vlaneseq
    %v118 = vshrl.u32 %v117, 7
    %v119 = vsub.s32 0, %v118
    %v120 = vrot.slane %v115, %v119
    %vm122 = vcmask 31744
    %v124 = vsel %vm122, %v113, 0
    %vm126 = vcmask 1043456
    %v128 = vsel %vm126, %v114, 0
    %130 = vmatprep.subr.mxu0 0.0
    %131 = vmatpush1.msra.mxu0 %v128
    %132 = vmatprep.subr.mxu0 0.0
    %133 = vmatpush1.msra.mxu0 0.0
    %134 = vmatprep.subr.mxu0 0.0
    %135 = vmatpush1.msra.mxu0 0.0
    %136 = vmatprep.subr.mxu0 0.0
    %137 = vmatpush1.msra.mxu0 0.0
    %138 = vmatprep.subr.mxu0 0.0
    %139 = vmatpush1.msra.mxu0 0.0
    %140 = vmatprep.subr.mxu0 0.0
    %141 = vmatpush1.msra.mxu0 0.0
    %142 = vmatprep.subr.mxu0 0.0
    %143 = vmatpush1.msra.mxu0 0.0
    %144 = vmatprep.subr.mxu0 0.0
    %145 = vmatpush1.msra.mxu0 0.0
    %146 = vmatprep.subr.mxu0 0.0
    %147 = vmatpush1.msra.mxu0 0.0
    %148 = vmatprep.subr.mxu0 0.0
    %149 = vmatpush1.msra.mxu0 0.0
    %150 = vmatprep.subr.mxu0 0.0
    %151 = vmatpush1.msra.mxu0 0.0
    %152 = vmatprep.subr.mxu0 0.0
    %153 = vmatpush1.msra.mxu0 0.0
    %154 = vmatprep.subr.mxu0 0.0
    %155 = vmatpush1.msra.mxu0 0.0
    %156 = vmatprep.subr.mxu0 0.0
    %157 = vmatpush1.msra.mxu0 0.0
    %158 = vmatprep.subr.mxu0 0.0
    %159 = vmatpush1.msra.mxu0 0.0
    %160 = vmatprep.subr.mxu0 0.0
    %161 = vmatpush1.msra.mxu0 0.0
    %162 = vmatprep.subr.mxu0 0.0
    %163 = vmatpush1.msra.mxu0 0.0
    %164 = vmatprep.subr.mxu0 0.0
    %165 = vmatpush1.msra.mxu0 0.0
    %166 = vmatprep.subr.mxu0 0.0
    %167 = vmatpush1.msra.mxu0 0.0
    %168 = vmatprep.subr.mxu0 0.0
    %169 = vmatpush1.msra.mxu0 0.0
    %170 = vmatprep.subr.mxu0 0.0
    %171 = vmatpush1.msra.mxu0 0.0
    %172 = vmatprep.subr.mxu0 0.0
    %173 = vmatpush1.msra.mxu0 0.0
    %174 = vmatprep.subr.mxu0 0.0
    %175 = vmatpush1.msra.mxu0 0.0
    %176 = vmatprep.subr.mxu0 0.0
    %177 = vmatpush1.msra.mxu0 0.0
    %178 = vmatprep.subr.mxu0 0.0
    %179 = vmatpush1.msra.mxu0 0.0
    %180 = vmatprep.subr.mxu0 0.0
    %181 = vmatpush1.msra.mxu0 0.0
    %182 = vmatprep.subr.mxu0 0.0
    %183 = vmatpush1.msra.mxu0 0.0
    %184 = vmatprep.subr.mxu0 0.0
    %185 = vmatpush1.msra.mxu0 0.0
    %186 = vmatprep.subr.mxu0 0.0
    %187 = vmatpush1.msra.mxu0 0.0
    %188 = vmatprep.subr.mxu0 0.0
    %189 = vmatpush1.msra.mxu0 0.0
    %190 = vmatprep.subr.mxu0 0.0
    %191 = vmatpush1.msra.mxu0 0.0
    %192 = vmatprep.subr.mxu0 0.0
    %193 = vmatpush1.msra.mxu0 0.0
    %194 = vmatprep.mubr.f32.mxu0 0.0
    %195 = vmatmul.mubr.f32.gmra.mrb[0].mxu0 %v124
    %v196 = vpop.f32.mrb[0].mxu0
    %v197 = vadd.f32 %v120, %v196
    %v198 = vpop.f32.mrb[0].mxu0
    %199 = vdwg.mxu0
    %v200 = vmax.f32 %v197, 0.0
    %v201 = vld [vmem:[%s11] sm:$0x1]
    %v203 = vlaneseq
    %v204 = vshrl.u32 %v203, 7
    %v205 = vsub.s32 0, %v204
    %v206 = vrot.slane %v201, %v205
    %v208 = vmul.f32 %v200, %v206
    %vm209 = vcmask 123904
    %v210 = vsel %vm209, %v208, 0.0
    %211 = vadd.xlane.f32.xlu0 %v210
    %v212 = vpop.xlane.xlu0 %211
    %v213 = vld [vmem:[#allocation5] sm:$0xff]
    %v214 = vld [vmem:[#allocation5 + $0x8] sm:$0xff]
    %v215 = vld [vmem:[%s5] sm:$0xff]
    %v216 = vld [vmem:[%s5 + $0x8] sm:$0x1]
    %v217 = vld [vmem:[%s6] sm:$0x1]
    %v219 = vlaneseq
    %v220 = vshrl.u32 %v219, 7
    %v221 = vsub.s32 0, %v220
    %v222 = vrot.slane %v217, %v221
    %vm224 = vcmask 72704
    %v226 = vsel %vm224, %v213, 0
    %v229 = vsel %vm224, %v214, 0
    %vm231 = vcmask 1040384
    %v233 = vsel %vm231, %v216, 0
    %235 = vmatprep.subr.mxu0 0.0
    %236 = vmatpush1.msra.mxu0 %v215
    %237 = vmatprep.subr.mxu0 0.0
    %238 = vmatpush1.msra.mxu0 %v233
    %239 = vmatprep.subr.mxu0 0.0
    %240 = vmatpush1.msra.mxu0 0.0
    %241 = vmatprep.subr.mxu0 0.0
    %242 = vmatpush1.msra.mxu0 0.0
    %243 = vmatprep.subr.mxu0 0.0
    %244 = vmatpush1.msra.mxu0 0.0
    %245 = vmatprep.subr.mxu0 0.0
    %246 = vmatpush1.msra.mxu0 0.0
    %247 = vmatprep.subr.mxu0 0.0
    %248 = vmatpush1.msra.mxu0 0.0
    %249 = vmatprep.subr.mxu0 0.0
    %250 = vmatpush1.msra.mxu0 0.0
    %251 = vmatprep.subr.mxu0 0.0
    %252 = vmatpush1.msra.mxu0 0.0
    %253 = vmatprep.subr.mxu0 0.0
    %254 = vmatpush1.msra.mxu0 0.0
    %255 = vmatprep.subr.mxu0 0.0
    %256 = vmatpush1.msra.mxu0 0.0
    %257 = vmatprep.subr.mxu0 0.0
    %258 = vmatpush1.msra.mxu0 0.0
    %259 = vmatprep.subr.mxu0 0.0
    %260 = vmatpush1.msra.mxu0 0.0
    %261 = vmatprep.subr.mxu0 0.0
    %262 = vmatpush1.msra.mxu0 0.0
    %263 = vmatprep.subr.mxu0 0.0
    %264 = vmatpush1.msra.mxu0 0.0
    %265 = vmatprep.subr.mxu0 0.0
    %266 = vmatpush1.msra.mxu0 0.0
    %267 = vmatprep.subr.mxu0 0.0
    %268 = vmatpush1.msra.mxu0 0.0
    %269 = vmatprep.subr.mxu0 0.0
    %270 = vmatpush1.msra.mxu0 0.0
    %271 = vmatprep.subr.mxu0 0.0
    %272 = vmatpush1.msra.mxu0 0.0
    %273 = vmatprep.subr.mxu0 0.0
    %274 = vmatpush1.msra.mxu0 0.0
    %275 = vmatprep.subr.mxu0 0.0
    %276 = vmatpush1.msra.mxu0 0.0
    %277 = vmatprep.subr.mxu0 0.0
    %278 = vmatpush1.msra.mxu0 0.0
    %279 = vmatprep.subr.mxu0 0.0
    %280 = vmatpush1.msra.mxu0 0.0
    %281 = vmatprep.subr.mxu0 0.0
    %282 = vmatpush1.msra.mxu0 0.0
    %283 = vmatprep.subr.mxu0 0.0
    %284 = vmatpush1.msra.mxu0 0.0
    %285 = vmatprep.subr.mxu0 0.0
    %286 = vmatpush1.msra.mxu0 0.0
    %287 = vmatprep.subr.mxu0 0.0
    %288 = vmatpush1.msra.mxu0 0.0
    %289 = vmatprep.subr.mxu0 0.0
    %290 = vmatpush1.msra.mxu0 0.0
    %291 = vmatprep.subr.mxu0 0.0
    %292 = vmatpush1.msra.mxu0 0.0
    %293 = vmatprep.subr.mxu0 0.0
    %294 = vmatpush1.msra.mxu0 0.0
    %295 = vmatprep.subr.mxu0 0.0
    %296 = vmatpush1.msra.mxu0 0.0
    %297 = vmatprep.subr.mxu0 0.0
    %298 = vmatpush1.msra.mxu0 0.0
    %299 = vmatprep.mubr.f32.mxu0 0.0
    %300 = vmatmul.mubr.f32.gmra.mrb[0].mxu0 %v226
    %v301 = vpop.f32.mrb[0].mxu0
    %v302 = vadd.f32 %v222, %v301
    %v303 = vpop.f32.mrb[0].mxu0
    %304 = vmatprep.mubr.f32.mxu0 0.0
    %305 = vmatmul.mubr.f32.gmra.mrb[0].mxu0 %v229
    %v306 = vpop.f32.mrb[0].mxu0
    %v307 = vadd.f32 %v222, %v306
    %v308 = vpop.f32.mrb[0].mxu0
    %309 = vdwg.mxu0
    %v310 = vld [vmem:[#allocation8] sm:$0xff]
    %v311 = vld [vmem:[#allocation8 + $0x8] sm:$0xff]
    %v312 = vadd.f32 %v302, %v310
    %v313 = vadd.f32 %v307, %v311
    %vm314 = vcmask 261120
    %315 = vst.msk [vmem:[#allocation2] sm:$0xff] %vm314, %v312
    %316 = vst.msk [vmem:[#allocation2 + $0x8] sm:$0xff] %vm314, %v313
    %v317 = vld [vmem:[#allocation2] sm:$0xff]
    %v318 = vld [vmem:[#allocation2 + $0x8] sm:$0xff]
    %v319 = vld [vmem:[#allocation11] sm:$0xff]
    %v320 = vld [vmem:[#allocation11 + $0x8] sm:$0xff]
    %v321 = vld [vmem:[#allocation11 + $0x10] sm:$0xff]
    %v322 = vld [vmem:[#allocation11 + $0x18] sm:$0xff]
    %v323 = vld [vmem:[%s9] sm:$0x1]
    %v325 = vlaneseq
    %v326 = vshrl.u32 %v325, 7
    %v327 = vsub.s32 0, %v326
    %v328 = vrot.slane %v323, %v327
    %v331 = vsel %vm314, %v317, 0
    %v334 = vsel %vm314, %v318, 0
    %336 = vmatprep.subr.mxu0 0.0
    %337 = vmatpush1.msra.mxu0 %v319
    %338 = vmatprep.subr.mxu0 0.0
    %339 = vmatpush1.msra.mxu0 %v320
    %340 = vmatprep.subr.mxu0 0.0
    %341 = vmatpush1.msra.mxu0 %v321
    %342 = vmatprep.subr.mxu0 0.0
    %343 = vmatpush1.msra.mxu0 %v322
    %344 = vmatprep.subr.mxu0 0.0
    %345 = vmatpush1.msra.mxu0 0.0
    %346 = vmatprep.subr.mxu0 0.0
    %347 = vmatpush1.msra.mxu0 0.0
    %348 = vmatprep.subr.mxu0 0.0
    %349 = vmatpush1.msra.mxu0 0.0
    %350 = vmatprep.subr.mxu0 0.0
    %351 = vmatpush1.msra.mxu0 0.0
    %352 = vmatprep.subr.mxu0 0.0
    %353 = vmatpush1.msra.mxu0 0.0
    %354 = vmatprep.subr.mxu0 0.0
    %355 = vmatpush1.msra.mxu0 0.0
    %356 = vmatprep.subr.mxu0 0.0
    %357 = vmatpush1.msra.mxu0 0.0
    %358 = vmatprep.subr.mxu0 0.0
    %359 = vmatpush1.msra.mxu0 0.0
    %360 = vmatprep.subr.mxu0 0.0
    %361 = vmatpush1.msra.mxu0 0.0
    %362 = vmatprep.subr.mxu0 0.0
    %363 = vmatpush1.msra.mxu0 0.0
    %364 = vmatprep.subr.mxu0 0.0
    %365 = vmatpush1.msra.mxu0 0.0
    %366 = vmatprep.subr.mxu0 0.0
    %367 = vmatpush1.msra.mxu0 0.0
    %368 = vmatprep.subr.mxu0 0.0
    %369 = vmatpush1.msra.mxu0 0.0
    %370 = vmatprep.subr.mxu0 0.0
    %371 = vmatpush1.msra.mxu0 0.0
    %372 = vmatprep.subr.mxu0 0.0
    %373 = vmatpush1.msra.mxu0 0.0
    %374 = vmatprep.subr.mxu0 0.0
    %375 = vmatpush1.msra.mxu0 0.0
    %376 = vmatprep.subr.mxu0 0.0
    %377 = vmatpush1.msra.mxu0 0.0
    %378 = vmatprep.subr.mxu0 0.0
    %379 = vmatpush1.msra.mxu0 0.0
    %380 = vmatprep.subr.mxu0 0.0
    %381 = vmatpush1.msra.mxu0 0.0
    %382 = vmatprep.subr.mxu0 0.0
    %383 = vmatpush1.msra.mxu0 0.0
    %384 = vmatprep.subr.mxu0 0.0
    %385 = vmatpush1.msra.mxu0 0.0
    %386 = vmatprep.subr.mxu0 0.0
    %387 = vmatpush1.msra.mxu0 0.0
    %388 = vmatprep.subr.mxu0 0.0
    %389 = vmatpush1.msra.mxu0 0.0
    %390 = vmatprep.subr.mxu0 0.0
    %391 = vmatpush1.msra.mxu0 0.0
    %392 = vmatprep.subr.mxu0 0.0
    %393 = vmatpush1.msra.mxu0 0.0
    %394 = vmatprep.subr.mxu0 0.0
    %395 = vmatpush1.msra.mxu0 0.0
    %396 = vmatprep.subr.mxu0 0.0
    %397 = vmatpush1.msra.mxu0 0.0
    %398 = vmatprep.subr.mxu0 0.0
    %399 = vmatpush1.msra.mxu0 0.0
    %400 = vmatprep.mubr.f32.mxu0 0.0
    %401 = vmatmul.mubr.f32.gmra.mrb[0].mxu0 %v331
    %v402 = vpop.f32.mrb[0].mxu0
    %v403 = vadd.f32 %v328, %v402
    %v404 = vpop.f32.mrb[0].mxu0
    %405 = vmatprep.mubr.f32.mxu0 0.0
    %406 = vmatmul.mubr.f32.gmra.mrb[0].mxu0 %v334
    %v407 = vpop.f32.mrb[0].mxu0
    %v408 = vadd.f32 %v328, %v407
    %v409 = vpop.f32.mrb[0].mxu0
    %410 = vdwg.mxu0
    %411 = vst [vmem:[#allocation3] sm:$0xff] %v403
    %412 = vst [vmem:[#allocation3 + $0x8] sm:$0xff] %v408
    %v413 = vld [vmem:[#allocation13] sm:$0xff]
    %v414 = vld [vmem:[#allocation13 + $0x8] sm:$0xff]
    %v415 = vld [vmem:[#allocation13 + $0x10] sm:$0xff]
    %v416 = vld [vmem:[#allocation13 + $0x18] sm:$0xff]
    %v417 = vld [vmem:[#allocation3] sm:$0x3]
    %v419 = vsel %vm314, 0.0, 0
    %421 = vmatprep.subr.mxu0 0.0
    %422 = vmatpush1.msra.mxu0 %v413
    %423 = vmatprep.subr.mxu0 0.0
    %424 = vmatpush1.msra.mxu0 %v414
    %425 = vmatprep.subr.mxu0 0.0
    %426 = vmatpush1.msra.mxu0 %v415
    %427 = vmatprep.subr.mxu0 0.0
    %428 = vmatpush1.msra.mxu0 %v416
    %429 = vmatprep.subr.mxu0 0.0
    %430 = vmatpush1.msra.mxu0 0.0
    %431 = vmatprep.subr.mxu0 0.0
    %432 = vmatpush1.msra.mxu0 0.0
    %433 = vmatprep.subr.mxu0 0.0
    %434 = vmatpush1.msra.mxu0 0.0
    %435 = vmatprep.subr.mxu0 0.0
    %436 = vmatpush1.msra.mxu0 0.0
    %437 = vmatprep.subr.mxu0 0.0
    %438 = vmatpush1.msra.mxu0 0.0
    %439 = vmatprep.subr.mxu0 0.0
    %440 = vmatpush1.msra.mxu0 0.0
    %441 = vmatprep.subr.mxu0 0.0
    %442 = vmatpush1.msra.mxu0 0.0
    %443 = vmatprep.subr.mxu0 0.0
    %444 = vmatpush1.msra.mxu0 0.0
    %445 = vmatprep.subr.mxu0 0.0
    %446 = vmatpush1.msra.mxu0 0.0
    %447 = vmatprep.subr.mxu0 0.0
    %448 = vmatpush1.msra.mxu0 0.0
    %449 = vmatprep.subr.mxu0 0.0
    %450 = vmatpush1.msra.mxu0 0.0
    %451 = vmatprep.subr.mxu0 0.0
    %452 = vmatpush1.msra.mxu0 0.0
    %453 = vmatprep.subr.mxu0 0.0
    %454 = vmatpush1.msra.mxu0 0.0
    %455 = vmatprep.subr.mxu0 0.0
    %456 = vmatpush1.msra.mxu0 0.0
    %457 = vmatprep.subr.mxu0 0.0
    %458 = vmatpush1.msra.mxu0 0.0
    %459 = vmatprep.subr.mxu0 0.0
    %460 = vmatpush1.msra.mxu0 0.0
    %461 = vmatprep.subr.mxu0 0.0
    %462 = vmatpush1.msra.mxu0 0.0
    %463 = vmatprep.subr.mxu0 0.0
    %464 = vmatpush1.msra.mxu0 0.0
    %465 = vmatprep.subr.mxu0 0.0
    %466 = vmatpush1.msra.mxu0 0.0
    %467 = vmatprep.subr.mxu0 0.0
    %468 = vmatpush1.msra.mxu0 0.0
    %469 = vmatprep.subr.mxu0 0.0
    %470 = vmatpush1.msra.mxu0 0.0
    %471 = vmatprep.subr.mxu0 0.0
    %472 = vmatpush1.msra.mxu0 0.0
    %473 = vmatprep.subr.mxu0 0.0
    %474 = vmatpush1.msra.mxu0 0.0
    %475 = vmatprep.subr.mxu0 0.0
    %476 = vmatpush1.msra.mxu0 0.0
    %477 = vmatprep.subr.mxu0 0.0
    %478 = vmatpush1.msra.mxu0 0.0
    %479 = vmatprep.subr.mxu0 0.0
    %480 = vmatpush1.msra.mxu0 0.0
    %481 = vmatprep.subr.mxu0 0.0
    %482 = vmatpush1.msra.mxu0 0.0
    %483 = vmatprep.subr.mxu0 0.0
    %484 = vmatpush1.msra.mxu0 0.0
    %485 = vmatprep.mubr.f32.mxu0 0.0
    %486 = vmatmul.mubr.f32.gmra.mrb[0].mxu0 %v419
    %v487 = vpop.f32.mrb[0].mxu0
    %v488 = vadd.f32 %v417, %v487
    %v489 = vpop.f32.mrb[0].mxu0
    %490 = vdwg.mxu0
    %v491 = vxor.u32 %v488, 2147483648
    %v492 = vmul.f32 %v491, 1.442695
    %v493 = vpow.pop %v492
    %v494 = vadd.f32 %v493, 1.0
    %v495 = vrcp.pop %v494
    %v496 = vmul.f32 1.0, %v495
    %v497 = vtanh.pop %v488
    %v498 = vmul.f32 %v496, 0.0
    %500 = vrot.lane.b32.xlu0 %v497, 64
    %v501 = vpop.permute.xlu0 %500
    %v503 = vmul.f32 %v496, %v501
    %505 = vrot.lane.b32.xlu0 %v503, 32
    %v506 = vpop.permute.xlu0 %505
    %v508 = vadd.f32 %v498, %v506
    %v509 = vtanh.pop %v508
    %511 = vrot.lane.b32.xlu0 %v509, 64
    %v512 = vpop.permute.xlu0 %511
    %v514 = vmul.f32 %v496, %v512
    %516 = vrot.lane.b32.xlu0 %v514, 32
    %v517 = vpop.permute.xlu0 %516
    %vm519 = vcmask 254976
    %520 = vst.msk [vmem:[#allocation2] sm:$0x3] %vm519, %v517
    %v521 = vld [vmem:[#allocation3 + $0x2] sm:$0x3]
    %v522 = vsel %vm314, %v517, 0
    %524 = vmatprep.subr.mxu0 0.0
    %525 = vmatpush1.msra.mxu0 %v413
    %526 = vmatprep.subr.mxu0 0.0
    %527 = vmatpush1.msra.mxu0 %v414
    %528 = vmatprep.subr.mxu0 0.0
    %529 = vmatpush1.msra.mxu0 %v415
    %530 = vmatprep.subr.mxu0 0.0
    %531 = vmatpush1.msra.mxu0 %v416
    %532 = vmatprep.subr.mxu0 0.0
    %533 = vmatpush1.msra.mxu0 0.0
    %534 = vmatprep.subr.mxu0 0.0
    %535 = vmatpush1.msra.mxu0 0.0
    %536 = vmatprep.subr.mxu0 0.0
    %537 = vmatpush1.msra.mxu0 0.0
    %538 = vmatprep.subr.mxu0 0.0
    %539 = vmatpush1.msra.mxu0 0.0
    %540 = vmatprep.subr.mxu0 0.0
    %541 = vmatpush1.msra.mxu0 0.0
    %542 = vmatprep.subr.mxu0 0.0
    %543 = vmatpush1.msra.mxu0 0.0
    %544 = vmatprep.subr.mxu0 0.0
    %545 = vmatpush1.msra.mxu0 0.0
    %546 = vmatprep.subr.mxu0 0.0
    %547 = vmatpush1.msra.mxu0 0.0
    %548 = vmatprep.subr.mxu0 0.0
    %549 = vmatpush1.msra.mxu0 0.0
    %550 = vmatprep.subr.mxu0 0.0
    %551 = vmatpush1.msra.mxu0 0.0
    %552 = vmatprep.subr.mxu0 0.0
    %553 = vmatpush1.msra.mxu0 0.0
    %554 = vmatprep.subr.mxu0 0.0
    %555 = vmatpush1.msra.mxu0 0.0
    %556 = vmatprep.subr.mxu0 0.0
    %557 = vmatpush1.msra.mxu0 0.0
    %558 = vmatprep.subr.mxu0 0.0
    %559 = vmatpush1.msra.mxu0 0.0
    %560 = vmatprep.subr.mxu0 0.0
    %561 = vmatpush1.msra.mxu0 0.0
    %562 = vmatprep.subr.mxu0 0.0
    %563 = vmatpush1.msra.mxu0 0.0
    %564 = vmatprep.subr.mxu0 0.0
    %565 = vmatpush1.msra.mxu0 0.0
    %566 = vmatprep.subr.mxu0 0.0
    %567 = vmatpush1.msra.mxu0 0.0
    %568 = vmatprep.subr.mxu0 0.0
    %569 = vmatpush1.msra.mxu0 0.0
    %570 = vmatprep.subr.mxu0 0.0
    %571 = vmatpush1.msra.mxu0 0.0
    %572 = vmatprep.subr.mxu0 0.0
    %573 = vmatpush1.msra.mxu0 0.0
    %574 = vmatprep.subr.mxu0 0.0
    %575 = vmatpush1.msra.mxu0 0.0
    %576 = vmatprep.subr.mxu0 0.0
    %577 = vmatpush1.msra.mxu0 0.0
    %578 = vmatprep.subr.mxu0 0.0
    %579 = vmatpush1.msra.mxu0 0.0
    %580 = vmatprep.subr.mxu0 0.0
    %581 = vmatpush1.msra.mxu0 0.0
    %582 = vmatprep.subr.mxu0 0.0
    %583 = vmatpush1.msra.mxu0 0.0
    %584 = vmatprep.subr.mxu0 0.0
    %585 = vmatpush1.msra.mxu0 0.0
    %586 = vmatprep.subr.mxu0 0.0
    %587 = vmatpush1.msra.mxu0 0.0
    %588 = vmatprep.mubr.f32.mxu0 0.0
    %589 = vmatmul.mubr.f32.gmra.mrb[0].mxu0 %v522
    %v590 = vpop.f32.mrb[0].mxu0
    %v591 = vadd.f32 %v521, %v590
    %v592 = vpop.f32.mrb[0].mxu0
    %593 = vdwg.mxu0
    %v594 = vxor.u32 %v591, 2147483648
    %v595 = vmul.f32 %v594, 1.442695
    %v596 = vpow.pop %v595
    %v597 = vadd.f32 %v596, 1.0
    %v598 = vrcp.pop %v597
    %v599 = vmul.f32 1.0, %v598
    %v600 = vtanh.pop %v591
    %v601 = vmul.f32 %v599, %v508
    %603 = vrot.lane.b32.xlu0 %v600, 64
    %v604 = vpop.permute.xlu0 %603
    %v606 = vmul.f32 %v599, %v604
    %608 = vrot.lane.b32.xlu0 %v606, 32
    %v609 = vpop.permute.xlu0 %608
    %v611 = vadd.f32 %v601, %v609
    %v612 = vtanh.pop %v611
    %614 = vrot.lane.b32.xlu0 %v612, 64
    %v615 = vpop.permute.xlu0 %614
    %v617 = vmul.f32 %v599, %v615
    %619 = vrot.lane.b32.xlu0 %v617, 32
    %v620 = vpop.permute.xlu0 %619
    %622 = vst.msk [vmem:[#allocation2 + $0x2] sm:$0x3] %vm519, %v620
    %v623 = vld [vmem:[#allocation3 + $0x4] sm:$0x3]
    %v624 = vsel %vm314, %v620, 0
    %626 = vmatprep.subr.mxu0 0.0
    %627 = vmatpush1.msra.mxu0 %v413
    %628 = vmatprep.subr.mxu0 0.0
    %629 = vmatpush1.msra.mxu0 %v414
    %630 = vmatprep.subr.mxu0 0.0
    %631 = vmatpush1.msra.mxu0 %v415
    %632 = vmatprep.subr.mxu0 0.0
    %633 = vmatpush1.msra.mxu0 %v416
    %634 = vmatprep.subr.mxu0 0.0
    %635 = vmatpush1.msra.mxu0 0.0
    %636 = vmatprep.subr.mxu0 0.0
    %637 = vmatpush1.msra.mxu0 0.0
    %638 = vmatprep.subr.mxu0 0.0
    %639 = vmatpush1.msra.mxu0 0.0
    %640 = vmatprep.subr.mxu0 0.0
    %641 = vmatpush1.msra.mxu0 0.0
    %642 = vmatprep.subr.mxu0 0.0
    %643 = vmatpush1.msra.mxu0 0.0
    %644 = vmatprep.subr.mxu0 0.0
    %645 = vmatpush1.msra.mxu0 0.0
    %646 = vmatprep.subr.mxu0 0.0
    %647 = vmatpush1.msra.mxu0 0.0
    %648 = vmatprep.subr.mxu0 0.0
    %649 = vmatpush1.msra.mxu0 0.0
    %650 = vmatprep.subr.mxu0 0.0
    %651 = vmatpush1.msra.mxu0 0.0
    %652 = vmatprep.subr.mxu0 0.0
    %653 = vmatpush1.msra.mxu0 0.0
    %654 = vmatprep.subr.mxu0 0.0
    %655 = vmatpush1.msra.mxu0 0.0
    %656 = vmatprep.subr.mxu0 0.0
    %657 = vmatpush1.msra.mxu0 0.0
    %658 = vmatprep.subr.mxu0 0.0
    %659 = vmatpush1.msra.mxu0 0.0
    %660 = vmatprep.subr.mxu0 0.0
    %661 = vmatpush1.msra.mxu0 0.0
    %662 = vmatprep.subr.mxu0 0.0
    %663 = vmatpush1.msra.mxu0 0.0
    %664 = vmatprep.subr.mxu0 0.0
    %665 = vmatpush1.msra.mxu0 0.0
    %666 = vmatprep.subr.mxu0 0.0
    %667 = vmatpush1.msra.mxu0 0.0
    %668 = vmatprep.subr.mxu0 0.0
    %669 = vmatpush1.msra.mxu0 0.0
    %670 = vmatprep.subr.mxu0 0.0
    %671 = vmatpush1.msra.mxu0 0.0
    %672 = vmatprep.subr.mxu0 0.0
    %673 = vmatpush1.msra.mxu0 0.0
    %674 = vmatprep.subr.mxu0 0.0
    %675 = vmatpush1.msra.mxu0 0.0
    %676 = vmatprep.subr.mxu0 0.0
    %677 = vmatpush1.msra.mxu0 0.0
    %678 = vmatprep.subr.mxu0 0.0
    %679 = vmatpush1.msra.mxu0 0.0
    %680 = vmatprep.subr.mxu0 0.0
    %681 = vmatpush1.msra.mxu0 0.0
    %682 = vmatprep.subr.mxu0 0.0
    %683 = vmatpush1.msra.mxu0 0.0
    %684 = vmatprep.subr.mxu0 0.0
    %685 = vmatpush1.msra.mxu0 0.0
    %686 = vmatprep.subr.mxu0 0.0
    %687 = vmatpush1.msra.mxu0 0.0
    %688 = vmatprep.subr.mxu0 0.0
    %689 = vmatpush1.msra.mxu0 0.0
    %690 = vmatprep.mubr.f32.mxu0 0.0
    %691 = vmatmul.mubr.f32.gmra.mrb[0].mxu0 %v624
    %v692 = vpop.f32.mrb[0].mxu0
    %v693 = vadd.f32 %v623, %v692
    %v694 = vpop.f32.mrb[0].mxu0
    %695 = vdwg.mxu0
    %v696 = vxor.u32 %v693, 2147483648
    %v697 = vmul.f32 %v696, 1.442695
    %v698 = vpow.pop %v697
    %v699 = vadd.f32 %v698, 1.0
    %v700 = vrcp.pop %v699
    %v701 = vmul.f32 1.0, %v700
    %v702 = vtanh.pop %v693
    %v703 = vmul.f32 %v701, %v611
    %705 = vrot.lane.b32.xlu0 %v702, 64
    %v706 = vpop.permute.xlu0 %705
    %v708 = vmul.f32 %v701, %v706
    %710 = vrot.lane.b32.xlu0 %v708, 32
    %v711 = vpop.permute.xlu0 %710
    %v713 = vadd.f32 %v703, %v711
    %v714 = vtanh.pop %v713
    %716 = vrot.lane.b32.xlu0 %v714, 64
    %v717 = vpop.permute.xlu0 %716
    %v719 = vmul.f32 %v701, %v717
    %721 = vrot.lane.b32.xlu0 %v719, 32
    %v722 = vpop.permute.xlu0 %721
    %724 = vst.msk [vmem:[#allocation2 + $0x4] sm:$0x3] %vm519, %v722
    %v725 = vld [vmem:[#allocation3 + $0x6] sm:$0x3]
    %v726 = vsel %vm314, %v722, 0
    %728 = vmatprep.subr.mxu0 0.0
    %729 = vmatpush1.msra.mxu0 %v413
    %730 = vmatprep.subr.mxu0 0.0
    %731 = vmatpush1.msra.mxu0 %v414
    %732 = vmatprep.subr.mxu0 0.0
    %733 = vmatpush1.msra.mxu0 %v415
    %734 = vmatprep.subr.mxu0 0.0
    %735 = vmatpush1.msra.mxu0 %v416
    %736 = vmatprep.subr.mxu0 0.0
    %737 = vmatpush1.msra.mxu0 0.0
    %738 = vmatprep.subr.mxu0 0.0
    %739 = vmatpush1.msra.mxu0 0.0
    %740 = vmatprep.subr.mxu0 0.0
    %741 = vmatpush1.msra.mxu0 0.0
    %742 = vmatprep.subr.mxu0 0.0
    %743 = vmatpush1.msra.mxu0 0.0
    %744 = vmatprep.subr.mxu0 0.0
    %745 = vmatpush1.msra.mxu0 0.0
    %746 = vmatprep.subr.mxu0 0.0
    %747 = vmatpush1.msra.mxu0 0.0
    %748 = vmatprep.subr.mxu0 0.0
    %749 = vmatpush1.msra.mxu0 0.0
    %750 = vmatprep.subr.mxu0 0.0
    %751 = vmatpush1.msra.mxu0 0.0
    %752 = vmatprep.subr.mxu0 0.0
    %753 = vmatpush1.msra.mxu0 0.0
    %754 = vmatprep.subr.mxu0 0.0
    %755 = vmatpush1.msra.mxu0 0.0
    %756 = vmatprep.subr.mxu0 0.0
    %757 = vmatpush1.msra.mxu0 0.0
    %758 = vmatprep.subr.mxu0 0.0
    %759 = vmatpush1.msra.mxu0 0.0
    %760 = vmatprep.subr.mxu0 0.0
    %761 = vmatpush1.msra.mxu0 0.0
    %762 = vmatprep.subr.mxu0 0.0
    %763 = vmatpush1.msra.mxu0 0.0
    %764 = vmatprep.subr.mxu0 0.0
    %765 = vmatpush1.msra.mxu0 0.0
    %766 = vmatprep.subr.mxu0 0.0
    %767 = vmatpush1.msra.mxu0 0.0
    %768 = vmatprep.subr.mxu0 0.0
    %769 = vmatpush1.msra.mxu0 0.0
    %770 = vmatprep.subr.mxu0 0.0
    %771 = vmatpush1.msra.mxu0 0.0
    %772 = vmatprep.subr.mxu0 0.0
    %773 = vmatpush1.msra.mxu0 0.0
    %774 = vmatprep.subr.mxu0 0.0
    %775 = vmatpush1.msra.mxu0 0.0
    %776 = vmatprep.subr.mxu0 0.0
    %777 = vmatpush1.msra.mxu0 0.0
    %778 = vmatprep.subr.mxu0 0.0
    %779 = vmatpush1.msra.mxu0 0.0
    %780 = vmatprep.subr.mxu0 0.0
    %781 = vmatpush1.msra.mxu0 0.0
    %782 = vmatprep.subr.mxu0 0.0
    %783 = vmatpush1.msra.mxu0 0.0
    %784 = vmatprep.subr.mxu0 0.0
    %785 = vmatpush1.msra.mxu0 0.0
    %786 = vmatprep.subr.mxu0 0.0
    %787 = vmatpush1.msra.mxu0 0.0
    %788 = vmatprep.subr.mxu0 0.0
    %789 = vmatpush1.msra.mxu0 0.0
    %790 = vmatprep.subr.mxu0 0.0
    %791 = vmatpush1.msra.mxu0 0.0
    %792 = vmatprep.mubr.f32.mxu0 0.0
    %793 = vmatmul.mubr.f32.gmra.mrb[0].mxu0 %v726
    %v794 = vpop.f32.mrb[0].mxu0
    %v795 = vadd.f32 %v725, %v794
    %v796 = vpop.f32.mrb[0].mxu0
    %797 = vdwg.mxu0
    %v798 = vxor.u32 %v795, 2147483648
    %v799 = vmul.f32 %v798, 1.442695
    %v800 = vpow.pop %v799
    %v801 = vadd.f32 %v800, 1.0
    %v802 = vrcp.pop %v801
    %v803 = vmul.f32 1.0, %v802
    %v804 = vtanh.pop %v795
    %v805 = vmul.f32 %v803, %v713
    %807 = vrot.lane.b32.xlu0 %v804, 64
    %v808 = vpop.permute.xlu0 %807
    %v810 = vmul.f32 %v803, %v808
    %812 = vrot.lane.b32.xlu0 %v810, 32
    %v813 = vpop.permute.xlu0 %812
    %v815 = vadd.f32 %v805, %v813
    %v816 = vtanh.pop %v815
    %818 = vrot.lane.b32.xlu0 %v816, 64
    %v819 = vpop.permute.xlu0 %818
    %v821 = vmul.f32 %v803, %v819
    %823 = vrot.lane.b32.xlu0 %v821, 32
    %v824 = vpop.permute.xlu0 %823
    %826 = vst.msk [vmem:[#allocation2 + $0x6] sm:$0x3] %vm519, %v824
    %v827 = vld [vmem:[#allocation3 + $0x8] sm:$0x3]
    %v828 = vsel %vm314, %v824, 0
    %830 = vmatprep.subr.mxu0 0.0
    %831 = vmatpush1.msra.mxu0 %v413
    %832 = vmatprep.subr.mxu0 0.0
    %833 = vmatpush1.msra.mxu0 %v414
    %834 = vmatprep.subr.mxu0 0.0
    %835 = vmatpush1.msra.mxu0 %v415
    %836 = vmatprep.subr.mxu0 0.0
    %837 = vmatpush1.msra.mxu0 %v416
    %838 = vmatprep.subr.mxu0 0.0
    %839 = vmatpush1.msra.mxu0 0.0
    %840 = vmatprep.subr.mxu0 0.0
    %841 = vmatpush1.msra.mxu0 0.0
    %842 = vmatprep.subr.mxu0 0.0
    %843 = vmatpush1.msra.mxu0 0.0
    %844 = vmatprep.subr.mxu0 0.0
    %845 = vmatpush1.msra.mxu0 0.0
    %846 = vmatprep.subr.mxu0 0.0
    %847 = vmatpush1.msra.mxu0 0.0
    %848 = vmatprep.subr.mxu0 0.0
    %849 = vmatpush1.msra.mxu0 0.0
    %850 = vmatprep.subr.mxu0 0.0
    %851 = vmatpush1.msra.mxu0 0.0
    %852 = vmatprep.subr.mxu0 0.0
    %853 = vmatpush1.msra.mxu0 0.0
    %854 = vmatprep.subr.mxu0 0.0
    %855 = vmatpush1.msra.mxu0 0.0
    %856 = vmatprep.subr.mxu0 0.0
    %857 = vmatpush1.msra.mxu0 0.0
    %858 = vmatprep.subr.mxu0 0.0
    %859 = vmatpush1.msra.mxu0 0.0
    %860 = vmatprep.subr.mxu0 0.0
    %861 = vmatpush1.msra.mxu0 0.0
    %862 = vmatprep.subr.mxu0 0.0
    %863 = vmatpush1.msra.mxu0 0.0
    %864 = vmatprep.subr.mxu0 0.0
    %865 = vmatpush1.msra.mxu0 0.0
    %866 = vmatprep.subr.mxu0 0.0
    %867 = vmatpush1.msra.mxu0 0.0
    %868 = vmatprep.subr.mxu0 0.0
    %869 = vmatpush1.msra.mxu0 0.0
    %870 = vmatprep.subr.mxu0 0.0
    %871 = vmatpush1.msra.mxu0 0.0
    %872 = vmatprep.subr.mxu0 0.0
    %873 = vmatpush1.msra.mxu0 0.0
    %874 = vmatprep.subr.mxu0 0.0
    %875 = vmatpush1.msra.mxu0 0.0
    %876 = vmatprep.subr.mxu0 0.0
    %877 = vmatpush1.msra.mxu0 0.0
    %878 = vmatprep.subr.mxu0 0.0
    %879 = vmatpush1.msra.mxu0 0.0
    %880 = vmatprep.subr.mxu0 0.0
    %881 = vmatpush1.msra.mxu0 0.0
    %882 = vmatprep.subr.mxu0 0.0
    %883 = vmatpush1.msra.mxu0 0.0
    %884 = vmatprep.subr.mxu0 0.0
    %885 = vmatpush1.msra.mxu0 0.0
    %886 = vmatprep.subr.mxu0 0.0
    %887 = vmatpush1.msra.mxu0 0.0
    %888 = vmatprep.subr.mxu0 0.0
    %889 = vmatpush1.msra.mxu0 0.0
    %890 = vmatprep.subr.mxu0 0.0
    %891 = vmatpush1.msra.mxu0 0.0
    %892 = vmatprep.subr.mxu0 0.0
    %893 = vmatpush1.msra.mxu0 0.0
    %894 = vmatprep.mubr.f32.mxu0 0.0
    %895 = vmatmul.mubr.f32.gmra.mrb[0].mxu0 %v828
    %v896 = vpop.f32.mrb[0].mxu0
    %v897 = vadd.f32 %v827, %v896
    %v898 = vpop.f32.mrb[0].mxu0
    %899 = vdwg.mxu0
    %v900 = vxor.u32 %v897, 2147483648
    %v901 = vmul.f32 %v900, 1.442695
    %v902 = vpow.pop %v901
    %v903 = vadd.f32 %v902, 1.0
    %v904 = vrcp.pop %v903
    %v905 = vmul.f32 1.0, %v904
    %v906 = vtanh.pop %v897
    %v907 = vmul.f32 %v905, %v815
    %909 = vrot.lane.b32.xlu0 %v906, 64
    %v910 = vpop.permute.xlu0 %909
    %v912 = vmul.f32 %v905, %v910
    %914 = vrot.lane.b32.xlu0 %v912, 32
    %v915 = vpop.permute.xlu0 %914
    %v917 = vadd.f32 %v907, %v915
    %v918 = vtanh.pop %v917
    %920 = vrot.lane.b32.xlu0 %v918, 64
    %v921 = vpop.permute.xlu0 %920
    %v923 = vmul.f32 %v905, %v921
    %925 = vrot.lane.b32.xlu0 %v923, 32
    %v926 = vpop.permute.xlu0 %925
    %928 = vst.msk [vmem:[#allocation2 + $0x8] sm:$0x3] %vm519, %v926
    %v929 = vld [vmem:[#allocation3 + $0xa] sm:$0x3]
    %v930 = vsel %vm314, %v926, 0
    %932 = vmatprep.subr.mxu0 0.0
    %933 = vmatpush1.msra.mxu0 %v413
    %934 = vmatprep.subr.mxu0 0.0
    %935 = vmatpush1.msra.mxu0 %v414
    %936 = vmatprep.subr.mxu0 0.0
    %937 = vmatpush1.msra.mxu0 %v415
    %938 = vmatprep.subr.mxu0 0.0
    %939 = vmatpush1.msra.mxu0 %v416
    %940 = vmatprep.subr.mxu0 0.0
    %941 = vmatpush1.msra.mxu0 0.0
    %942 = vmatprep.subr.mxu0 0.0
    %943 = vmatpush1.msra.mxu0 0.0
    %944 = vmatprep.subr.mxu0 0.0
    %945 = vmatpush1.msra.mxu0 0.0
    %946 = vmatprep.subr.mxu0 0.0
    %947 = vmatpush1.msra.mxu0 0.0
    %948 = vmatprep.subr.mxu0 0.0
    %949 = vmatpush1.msra.mxu0 0.0
    %950 = vmatprep.subr.mxu0 0.0
    %951 = vmatpush1.msra.mxu0 0.0
    %952 = vmatprep.subr.mxu0 0.0
    %953 = vmatpush1.msra.mxu0 0.0
    %954 = vmatprep.subr.mxu0 0.0
    %955 = vmatpush1.msra.mxu0 0.0
    %956 = vmatprep.subr.mxu0 0.0
    %957 = vmatpush1.msra.mxu0 0.0
    %958 = vmatprep.subr.mxu0 0.0
    %959 = vmatpush1.msra.mxu0 0.0
    %960 = vmatprep.subr.mxu0 0.0
    %961 = vmatpush1.msra.mxu0 0.0
    %962 = vmatprep.subr.mxu0 0.0
    %963 = vmatpush1.msra.mxu0 0.0
    %964 = vmatprep.subr.mxu0 0.0
    %965 = vmatpush1.msra.mxu0 0.0
    %966 = vmatprep.subr.mxu0 0.0
    %967 = vmatpush1.msra.mxu0 0.0
    %968 = vmatprep.subr.mxu0 0.0
    %969 = vmatpush1.msra.mxu0 0.0
    %970 = vmatprep.subr.mxu0 0.0
    %971 = vmatpush1.msra.mxu0 0.0
    %972 = vmatprep.subr.mxu0 0.0
    %973 = vmatpush1.msra.mxu0 0.0
    %974 = vmatprep.subr.mxu0 0.0
    %975 = vmatpush1.msra.mxu0 0.0
    %976 = vmatprep.subr.mxu0 0.0
    %977 = vmatpush1.msra.mxu0 0.0
    %978 = vmatprep.subr.mxu0 0.0
    %979 = vmatpush1.msra.mxu0 0.0
    %980 = vmatprep.subr.mxu0 0.0
    %981 = vmatpush1.msra.mxu0 0.0
    %982 = vmatprep.subr.mxu0 0.0
    %983 = vmatpush1.msra.mxu0 0.0
    %984 = vmatprep.subr.mxu0 0.0
    %985 = vmatpush1.msra.mxu0 0.0
    %986 = vmatprep.subr.mxu0 0.0
    %987 = vmatpush1.msra.mxu0 0.0
    %988 = vmatprep.subr.mxu0 0.0
    %989 = vmatpush1.msra.mxu0 0.0
    %990 = vmatprep.subr.mxu0 0.0
    %991 = vmatpush1.msra.mxu0 0.0
    %992 = vmatprep.subr.mxu0 0.0
    %993 = vmatpush1.msra.mxu0 0.0
    %994 = vmatprep.subr.mxu0 0.0
    %995 = vmatpush1.msra.mxu0 0.0
    %996 = vmatprep.mubr.f32.mxu0 0.0
    %997 = vmatmul.mubr.f32.gmra.mrb[0].mxu0 %v930
    %v998 = vpop.f32.mrb[0].mxu0
    %v999 = vadd.f32 %v929, %v998
    %v1000 = vpop.f32.mrb[0].mxu0
    %1001 = vdwg.mxu0
    %v1002 = vxor.u32 %v999, 2147483648
    %v1003 = vmul.f32 %v1002, 1.442695
    %v1004 = vpow.pop %v1003
    %v1005 = vadd.f32 %v1004, 1.0
    %v1006 = vrcp.pop %v1005
    %v1007 = vmul.f32 1.0, %v1006
    %v1008 = vtanh.pop %v999
    %v1009 = vmul.f32 %v1007, %v917
    %1011 = vrot.lane.b32.xlu0 %v1008, 64
    %v1012 = vpop.permute.xlu0 %1011
    %v1014 = vmul.f32 %v1007, %v1012
    %1016 = vrot.lane.b32.xlu0 %v1014, 32
    %v1017 = vpop.permute.xlu0 %1016
    %v1019 = vadd.f32 %v1009, %v1017
    %v1020 = vtanh.pop %v1019
    %1022 = vrot.lane.b32.xlu0 %v1020, 64
    %v1023 = vpop.permute.xlu0 %1022
    %v1025 = vmul.f32 %v1007, %v1023
    %1027 = vrot.lane.b32.xlu0 %v1025, 32
    %v1028 = vpop.permute.xlu0 %1027
    %1030 = vst.msk [vmem:[#allocation2 + $0xa] sm:$0x3] %vm519, %v1028
    %v1031 = vld [vmem:[#allocation3 + $0xc] sm:$0x3]
    %v1032 = vsel %vm314, %v1028, 0
    %1034 = vmatprep.subr.mxu0 0.0
    %1035 = vmatpush1.msra.mxu0 %v413
    %1036 = vmatprep.subr.mxu0 0.0
    %1037 = vmatpush1.msra.mxu0 %v414
    %1038 = vmatprep.subr.mxu0 0.0
    %1039 = vmatpush1.msra.mxu0 %v415
    %1040 = vmatprep.subr.mxu0 0.0
    %1041 = vmatpush1.msra.mxu0 %v416
    %1042 = vmatprep.subr.mxu0 0.0
    %1043 = vmatpush1.msra.mxu0 0.0
    %1044 = vmatprep.subr.mxu0 0.0
    %1045 = vmatpush1.msra.mxu0 0.0
    %1046 = vmatprep.subr.mxu0 0.0
    %1047 = vmatpush1.msra.mxu0 0.0
    %1048 = vmatprep.subr.mxu0 0.0
    %1049 = vmatpush1.msra.mxu0 0.0
    %1050 = vmatprep.subr.mxu0 0.0
    %1051 = vmatpush1.msra.mxu0 0.0
    %1052 = vmatprep.subr.mxu0 0.0
    %1053 = vmatpush1.msra.mxu0 0.0
    %1054 = vmatprep.subr.mxu0 0.0
    %1055 = vmatpush1.msra.mxu0 0.0
    %1056 = vmatprep.subr.mxu0 0.0
    %1057 = vmatpush1.msra.mxu0 0.0
    %1058 = vmatprep.subr.mxu0 0.0
    %1059 = vmatpush1.msra.mxu0 0.0
    %1060 = vmatprep.subr.mxu0 0.0
    %1061 = vmatpush1.msra.mxu0 0.0
    %1062 = vmatprep.subr.mxu0 0.0
    %1063 = vmatpush1.msra.mxu0 0.0
    %1064 = vmatprep.subr.mxu0 0.0
    %1065 = vmatpush1.msra.mxu0 0.0
    %1066 = vmatprep.subr.mxu0 0.0
    %1067 = vmatpush1.msra.mxu0 0.0
    %1068 = vmatprep.subr.mxu0 0.0
    %1069 = vmatpush1.msra.mxu0 0.0
    %1070 = vmatprep.subr.mxu0 0.0
    %1071 = vmatpush1.msra.mxu0 0.0
    %1072 = vmatprep.subr.mxu0 0.0
    %1073 = vmatpush1.msra.mxu0 0.0
    %1074 = vmatprep.subr.mxu0 0.0
    %1075 = vmatpush1.msra.mxu0 0.0
    %1076 = vmatprep.subr.mxu0 0.0
    %1077 = vmatpush1.msra.mxu0 0.0
    %1078 = vmatprep.subr.mxu0 0.0
    %1079 = vmatpush1.msra.mxu0 0.0
    %1080 = vmatprep.subr.mxu0 0.0
    %1081 = vmatpush1.msra.mxu0 0.0
    %1082 = vmatprep.subr.mxu0 0.0
    %1083 = vmatpush1.msra.mxu0 0.0
    %1084 = vmatprep.subr.mxu0 0.0
    %1085 = vmatpush1.msra.mxu0 0.0
    %1086 = vmatprep.subr.mxu0 0.0
    %1087 = vmatpush1.msra.mxu0 0.0
    %1088 = vmatprep.subr.mxu0 0.0
    %1089 = vmatpush1.msra.mxu0 0.0
    %1090 = vmatprep.subr.mxu0 0.0
    %1091 = vmatpush1.msra.mxu0 0.0
    %1092 = vmatprep.subr.mxu0 0.0
    %1093 = vmatpush1.msra.mxu0 0.0
    %1094 = vmatprep.subr.mxu0 0.0
    %1095 = vmatpush1.msra.mxu0 0.0
    %1096 = vmatprep.subr.mxu0 0.0
    %1097 = vmatpush1.msra.mxu0 0.0
    %1098 = vmatprep.mubr.f32.mxu0 0.0
    %1099 = vmatmul.mubr.f32.gmra.mrb[0].mxu0 %v1032
    %v1100 = vpop.f32.mrb[0].mxu0
    %v1101 = vadd.f32 %v1031, %v1100
    %v1102 = vpop.f32.mrb[0].mxu0
    %1103 = vdwg.mxu0
    %v1104 = vxor.u32 %v1101, 2147483648
    %v1105 = vmul.f32 %v1104, 1.442695
    %v1106 = vpow.pop %v1105
    %v1107 = vadd.f32 %v1106, 1.0
    %v1108 = vrcp.pop %v1107
    %v1109 = vmul.f32 1.0, %v1108
    %v1110 = vtanh.pop %v1101
    %v1111 = vmul.f32 %v1109, %v1019
    %1113 = vrot.lane.b32.xlu0 %v1110, 64
    %v1114 = vpop.permute.xlu0 %1113
    %v1116 = vmul.f32 %v1109, %v1114
    %1118 = vrot.lane.b32.xlu0 %v1116, 32
    %v1119 = vpop.permute.xlu0 %1118
    %v1121 = vadd.f32 %v1111, %v1119
    %v1122 = vtanh.pop %v1121
    %1124 = vrot.lane.b32.xlu0 %v1122, 64
    %v1125 = vpop.permute.xlu0 %1124
    %v1127 = vmul.f32 %v1109, %v1125
    %1129 = vrot.lane.b32.xlu0 %v1127, 32
    %v1130 = vpop.permute.xlu0 %1129
    %1132 = vst.msk [vmem:[#allocation2 + $0xc] sm:$0x3] %vm519, %v1130
    %v1133 = vld [vmem:[#allocation3 + $0xe] sm:$0x3]
    %v1134 = vsel %vm314, %v1130, 0
    %1136 = vmatprep.subr.mxu0 0.0
    %1137 = vmatpush1.msra.mxu0 %v413
    %1138 = vmatprep.subr.mxu0 0.0
    %1139 = vmatpush1.msra.mxu0 %v414
    %1140 = vmatprep.subr.mxu0 0.0
    %1141 = vmatpush1.msra.mxu0 %v415
    %1142 = vmatprep.subr.mxu0 0.0
    %1143 = vmatpush1.msra.mxu0 %v416
    %1144 = vmatprep.subr.mxu0 0.0
    %1145 = vmatpush1.msra.mxu0 0.0
    %1146 = vmatprep.subr.mxu0 0.0
    %1147 = vmatpush1.msra.mxu0 0.0
    %1148 = vmatprep.subr.mxu0 0.0
    %1149 = vmatpush1.msra.mxu0 0.0
    %1150 = vmatprep.subr.mxu0 0.0
    %1151 = vmatpush1.msra.mxu0 0.0
    %1152 = vmatprep.subr.mxu0 0.0
    %1153 = vmatpush1.msra.mxu0 0.0
    %1154 = vmatprep.subr.mxu0 0.0
    %1155 = vmatpush1.msra.mxu0 0.0
    %1156 = vmatprep.subr.mxu0 0.0
    %1157 = vmatpush1.msra.mxu0 0.0
    %1158 = vmatprep.subr.mxu0 0.0
    %1159 = vmatpush1.msra.mxu0 0.0
    %1160 = vmatprep.subr.mxu0 0.0
    %1161 = vmatpush1.msra.mxu0 0.0
    %1162 = vmatprep.subr.mxu0 0.0
    %1163 = vmatpush1.msra.mxu0 0.0
    %1164 = vmatprep.subr.mxu0 0.0
    %1165 = vmatpush1.msra.mxu0 0.0
    %1166 = vmatprep.subr.mxu0 0.0
    %1167 = vmatpush1.msra.mxu0 0.0
    %1168 = vmatprep.subr.mxu0 0.0
    %1169 = vmatpush1.msra.mxu0 0.0
    %1170 = vmatprep.subr.mxu0 0.0
    %1171 = vmatpush1.msra.mxu0 0.0
    %1172 = vmatprep.subr.mxu0 0.0
    %1173 = vmatpush1.msra.mxu0 0.0
    %1174 = vmatprep.subr.mxu0 0.0
    %1175 = vmatpush1.msra.mxu0 0.0
    %1176 = vmatprep.subr.mxu0 0.0
    %1177 = vmatpush1.msra.mxu0 0.0
    %1178 = vmatprep.subr.mxu0 0.0
    %1179 = vmatpush1.msra.mxu0 0.0
    %1180 = vmatprep.subr.mxu0 0.0
    %1181 = vmatpush1.msra.mxu0 0.0
    %1182 = vmatprep.subr.mxu0 0.0
    %1183 = vmatpush1.msra.mxu0 0.0
    %1184 = vmatprep.subr.mxu0 0.0
    %1185 = vmatpush1.msra.mxu0 0.0
    %1186 = vmatprep.subr.mxu0 0.0
    %1187 = vmatpush1.msra.mxu0 0.0
    %1188 = vmatprep.subr.mxu0 0.0
    %1189 = vmatpush1.msra.mxu0 0.0
    %1190 = vmatprep.subr.mxu0 0.0
    %1191 = vmatpush1.msra.mxu0 0.0
    %1192 = vmatprep.subr.mxu0 0.0
    %1193 = vmatpush1.msra.mxu0 0.0
    %1194 = vmatprep.subr.mxu0 0.0
    %1195 = vmatpush1.msra.mxu0 0.0
    %1196 = vmatprep.subr.mxu0 0.0
    %1197 = vmatpush1.msra.mxu0 0.0
    %1198 = vmatprep.subr.mxu0 0.0
    %1199 = vmatpush1.msra.mxu0 0.0
    %1200 = vmatprep.mubr.f32.mxu0 0.0
    %1201 = vmatmul.mubr.f32.gmra.mrb[0].mxu0 %v1134
    %v1202 = vpop.f32.mrb[0].mxu0
    %v1203 = vadd.f32 %v1133, %v1202
    %v1204 = vpop.f32.mrb[0].mxu0
    %1205 = vdwg.mxu0
    %v1206 = vxor.u32 %v1203, 2147483648
    %v1207 = vmul.f32 %v1206, 1.442695
    %v1208 = vpow.pop %v1207
    %v1209 = vadd.f32 %v1208, 1.0
    %v1210 = vrcp.pop %v1209
    %v1211 = vmul.f32 1.0, %v1210
    %v1212 = vtanh.pop %v1203
    %v1213 = vmul.f32 %v1211, %v1121
    %1215 = vrot.lane.b32.xlu0 %v1212, 64
    %v1216 = vpop.permute.xlu0 %1215
    %v1218 = vmul.f32 %v1211, %v1216
    %1220 = vrot.lane.b32.xlu0 %v1218, 32
    %v1221 = vpop.permute.xlu0 %1220
    %v1223 = vadd.f32 %v1213, %v1221
    %v1224 = vtanh.pop %v1223
    %1226 = vrot.lane.b32.xlu0 %v1224, 64
    %v1227 = vpop.permute.xlu0 %1226
    %v1229 = vmul.f32 %v1211, %v1227
    %1231 = vrot.lane.b32.xlu0 %v1229, 32
    %v1232 = vpop.permute.xlu0 %1231
    %1234 = vst.msk [vmem:[#allocation2 + $0xe] sm:$0x3] %vm519, %v1232
    %v1235 = vld [vmem:[#allocation2] sm:$0xff]
    %v1236 = vld [vmem:[#allocation2 + $0x8] sm:$0xff]
    %s1237 = scalar_lea.vmem [#allocation11], 32
    %v1238 = vld [vmem:[%s1237] sm:$0xff]
    %v1239 = vld [vmem:[%s1237 + $0x8] sm:$0xff]
    %v1240 = vld [vmem:[%s1237 + $0x10] sm:$0xff]
    %v1241 = vld [vmem:[%s1237 + $0x18] sm:$0xff]
    %s1242 = scalar_lea.vmem %s9, 1
    %v1243 = vld [vmem:[%s1242] sm:$0x1]
    %v1245 = vlaneseq
    %v1246 = vshrl.u32 %v1245, 7
    %v1247 = vsub.s32 0, %v1246
    %v1248 = vrot.slane %v1243, %v1247
    %v1251 = vsel %vm314, %v1235, 0
    %v1254 = vsel %vm314, %v1236, 0
    %1256 = vmatprep.subr.mxu0 0.0
    %1257 = vmatpush1.msra.mxu0 %v1238
    %1258 = vmatprep.subr.mxu0 0.0
    %1259 = vmatpush1.msra.mxu0 %v1239
    %1260 = vmatprep.subr.mxu0 0.0
    %1261 = vmatpush1.msra.mxu0 %v1240
    %1262 = vmatprep.subr.mxu0 0.0
    %1263 = vmatpush1.msra.mxu0 %v1241
    %1264 = vmatprep.subr.mxu0 0.0
    %1265 = vmatpush1.msra.mxu0 0.0
    %1266 = vmatprep.subr.mxu0 0.0
    %1267 = vmatpush1.msra.mxu0 0.0
    %1268 = vmatprep.subr.mxu0 0.0
    %1269 = vmatpush1.msra.mxu0 0.0
    %1270 = vmatprep.subr.mxu0 0.0
    %1271 = vmatpush1.msra.mxu0 0.0
    %1272 = vmatprep.subr.mxu0 0.0
    %1273 = vmatpush1.msra.mxu0 0.0
    %1274 = vmatprep.subr.mxu0 0.0
    %1275 = vmatpush1.msra.mxu0 0.0
    %1276 = vmatprep.subr.mxu0 0.0
    %1277 = vmatpush1.msra.mxu0 0.0
    %1278 = vmatprep.subr.mxu0 0.0
    %1279 = vmatpush1.msra.mxu0 0.0
    %1280 = vmatprep.subr.mxu0 0.0
    %1281 = vmatpush1.msra.mxu0 0.0
    %1282 = vmatprep.subr.mxu0 0.0
    %1283 = vmatpush1.msra.mxu0 0.0
    %1284 = vmatprep.subr.mxu0 0.0
    %1285 = vmatpush1.msra.mxu0 0.0
    %1286 = vmatprep.subr.mxu0 0.0
    %1287 = vmatpush1.msra.mxu0 0.0
    %1288 = vmatprep.subr.mxu0 0.0
    %1289 = vmatpush1.msra.mxu0 0.0
    %1290 = vmatprep.subr.mxu0 0.0
    %1291 = vmatpush1.msra.mxu0 0.0
    %1292 = vmatprep.subr.mxu0 0.0
    %1293 = vmatpush1.msra.mxu0 0.0
    %1294 = vmatprep.subr.mxu0 0.0
    %1295 = vmatpush1.msra.mxu0 0.0
    %1296 = vmatprep.subr.mxu0 0.0
    %1297 = vmatpush1.msra.mxu0 0.0
    %1298 = vmatprep.subr.mxu0 0.0
    %1299 = vmatpush1.msra.mxu0 0.0
    %1300 = vmatprep.subr.mxu0 0.0
    %1301 = vmatpush1.msra.mxu0 0.0
    %1302 = vmatprep.subr.mxu0 0.0
    %1303 = vmatpush1.msra.mxu0 0.0
    %1304 = vmatprep.subr.mxu0 0.0
    %1305 = vmatpush1.msra.mxu0 0.0
    %1306 = vmatprep.subr.mxu0 0.0
    %1307 = vmatpush1.msra.mxu0 0.0
    %1308 = vmatprep.subr.mxu0 0.0
    %1309 = vmatpush1.msra.mxu0 0.0
    %1310 = vmatprep.subr.mxu0 0.0
    %1311 = vmatpush1.msra.mxu0 0.0
    %1312 = vmatprep.subr.mxu0 0.0
    %1313 = vmatpush1.msra.mxu0 0.0
    %1314 = vmatprep.subr.mxu0 0.0
    %1315 = vmatpush1.msra.mxu0 0.0
    %1316 = vmatprep.subr.mxu0 0.0
    %1317 = vmatpush1.msra.mxu0 0.0
    %1318 = vmatprep.subr.mxu0 0.0
    %1319 = vmatpush1.msra.mxu0 0.0
    %1320 = vmatprep.mubr.f32.mxu0 0.0
    %1321 = vmatmul.mubr.f32.gmra.mrb[0].mxu0 %v1251
    %v1322 = vpop.f32.mrb[0].mxu0
    %v1323 = vadd.f32 %v1248, %v1322
    %v1324 = vpop.f32.mrb[0].mxu0
    %1325 = vmatprep.mubr.f32.mxu0 0.0
    %1326 = vmatmul.mubr.f32.gmra.mrb[0].mxu0 %v1254
    %v1327 = vpop.f32.mrb[0].mxu0
    %v1328 = vadd.f32 %v1248, %v1327
    %v1329 = vpop.f32.mrb[0].mxu0
    %1330 = vdwg.mxu0
    %1331 = vst [vmem:[#allocation3] sm:$0xff] %v1323
    %1332 = vst [vmem:[#allocation3 + $0x8] sm:$0xff] %v1328
    %s1333 = scalar_lea.vmem [#allocation13], 32
    %v1334 = vld [vmem:[%s1333] sm:$0xff]
    %v1335 = vld [vmem:[%s1333 + $0x8] sm:$0xff]
    %v1336 = vld [vmem:[%s1333 + $0x10] sm:$0xff]
    %v1337 = vld [vmem:[%s1333 + $0x18] sm:$0xff]
    %v1338 = vld [vmem:[#allocation3] sm:$0x3]
    %1339 = vmatprep.subr.mxu0 0.0
    %1340 = vmatpush1.msra.mxu0 %v1334
    %1341 = vmatprep.subr.mxu0 0.0
    %1342 = vmatpush1.msra.mxu0 %v1335
    %1343 = vmatprep.subr.mxu0 0.0
    %1344 = vmatpush1.msra.mxu0 %v1336
    %1345 = vmatprep.subr.mxu0 0.0
    %1346 = vmatpush1.msra.mxu0 %v1337
    %1347 = vmatprep.subr.mxu0 0.0
    %1348 = vmatpush1.msra.mxu0 0.0
    %1349 = vmatprep.subr.mxu0 0.0
    %1350 = vmatpush1.msra.mxu0 0.0
    %1351 = vmatprep.subr.mxu0 0.0
    %1352 = vmatpush1.msra.mxu0 0.0
    %1353 = vmatprep.subr.mxu0 0.0
    %1354 = vmatpush1.msra.mxu0 0.0
    %1355 = vmatprep.subr.mxu0 0.0
    %1356 = vmatpush1.msra.mxu0 0.0
    %1357 = vmatprep.subr.mxu0 0.0
    %1358 = vmatpush1.msra.mxu0 0.0
    %1359 = vmatprep.subr.mxu0 0.0
    %1360 = vmatpush1.msra.mxu0 0.0
    %1361 = vmatprep.subr.mxu0 0.0
    %1362 = vmatpush1.msra.mxu0 0.0
    %1363 = vmatprep.subr.mxu0 0.0
    %1364 = vmatpush1.msra.mxu0 0.0
    %1365 = vmatprep.subr.mxu0 0.0
    %1366 = vmatpush1.msra.mxu0 0.0
    %1367 = vmatprep.subr.mxu0 0.0
    %1368 = vmatpush1.msra.mxu0 0.0
    %1369 = vmatprep.subr.mxu0 0.0
    %1370 = vmatpush1.msra.mxu0 0.0
    %1371 = vmatprep.subr.mxu0 0.0
    %1372 = vmatpush1.msra.mxu0 0.0
    %1373 = vmatprep.subr.mxu0 0.0
    %1374 = vmatpush1.msra.mxu0 0.0
    %1375 = vmatprep.subr.mxu0 0.0
    %1376 = vmatpush1.msra.mxu0 0.0
    %1377 = vmatprep.subr.mxu0 0.0
    %1378 = vmatpush1.msra.mxu0 0.0
    %1379 = vmatprep.subr.mxu0 0.0
    %1380 = vmatpush1.msra.mxu0 0.0
    %1381 = vmatprep.subr.mxu0 0.0
    %1382 = vmatpush1.msra.mxu0 0.0
    %1383 = vmatprep.subr.mxu0 0.0
    %1384 = vmatpush1.msra.mxu0 0.0
    %1385 = vmatprep.subr.mxu0 0.0
    %1386 = vmatpush1.msra.mxu0 0.0
    %1387 = vmatprep.subr.mxu0 0.0
    %1388 = vmatpush1.msra.mxu0 0.0
    %1389 = vmatprep.subr.mxu0 0.0
    %1390 = vmatpush1.msra.mxu0 0.0
    %1391 = vmatprep.subr.mxu0 0.0
    %1392 = vmatpush1.msra.mxu0 0.0
    %1393 = vmatprep.subr.mxu0 0.0
    %1394 = vmatpush1.msra.mxu0 0.0
    %1395 = vmatprep.subr.mxu0 0.0
    %1396 = vmatpush1.msra.mxu0 0.0
    %1397 = vmatprep.subr.mxu0 0.0
    %1398 = vmatpush1.msra.mxu0 0.0
    %1399 = vmatprep.subr.mxu0 0.0
    %1400 = vmatpush1.msra.mxu0 0.0
    %1401 = vmatprep.subr.mxu0 0.0
    %1402 = vmatpush1.msra.mxu0 0.0
    %1403 = vmatprep.mubr.f32.mxu0 0.0
    %1404 = vmatmul.mubr.f32.gmra.mrb[0].mxu0 %v419
    %v1405 = vpop.f32.mrb[0].mxu0
    %v1406 = vadd.f32 %v1338, %v1405
    %v1407 = vpop.f32.mrb[0].mxu0
    %1408 = vdwg.mxu0
    %v1409 = vxor.u32 %v1406, 2147483648
    %v1410 = vmul.f32 %v1409, 1.442695
    %v1411 = vpow.pop %v1410
    %v1412 = vadd.f32 %v1411, 1.0
    %v1413 = vrcp.pop %v1412
    %v1414 = vmul.f32 1.0, %v1413
    %v1415 = vtanh.pop %v1406
    %v1416 = vmul.f32 %v1414, 0.0
    %1418 = vrot.lane.b32.xlu0 %v1415, 64
    %v1419 = vpop.permute.xlu0 %1418
    %v1421 = vmul.f32 %v1414, %v1419
    %1423 = vrot.lane.b32.xlu0 %v1421, 32
    %v1424 = vpop.permute.xlu0 %1423
    %v1426 = vadd.f32 %v1416, %v1424
    %v1427 = vtanh.pop %v1426
    %1429 = vrot.lane.b32.xlu0 %v1427, 64
    %v1430 = vpop.permute.xlu0 %1429
    %v1432 = vmul.f32 %v1414, %v1430
    %v1433 = vld [vmem:[#allocation3 + $0x2] sm:$0x3]
    %1435 = vrot.lane.b32.xlu0 %v1432, 32
    %v1436 = vpop.permute.xlu0 %1435
    %v1437 = vsel %vm314, %v1436, 0
    %1439 = vmatprep.subr.mxu0 0.0
    %1440 = vmatpush1.msra.mxu0 %v1334
    %1441 = vmatprep.subr.mxu0 0.0
    %1442 = vmatpush1.msra.mxu0 %v1335
    %1443 = vmatprep.subr.mxu0 0.0
    %1444 = vmatpush1.msra.mxu0 %v1336
    %1445 = vmatprep.subr.mxu0 0.0
    %1446 = vmatpush1.msra.mxu0 %v1337
    %1447 = vmatprep.subr.mxu0 0.0
    %1448 = vmatpush1.msra.mxu0 0.0
    %1449 = vmatprep.subr.mxu0 0.0
    %1450 = vmatpush1.msra.mxu0 0.0
    %1451 = vmatprep.subr.mxu0 0.0
    %1452 = vmatpush1.msra.mxu0 0.0
    %1453 = vmatprep.subr.mxu0 0.0
    %1454 = vmatpush1.msra.mxu0 0.0
    %1455 = vmatprep.subr.mxu0 0.0
    %1456 = vmatpush1.msra.mxu0 0.0
    %1457 = vmatprep.subr.mxu0 0.0
    %1458 = vmatpush1.msra.mxu0 0.0
    %1459 = vmatprep.subr.mxu0 0.0
    %1460 = vmatpush1.msra.mxu0 0.0
    %1461 = vmatprep.subr.mxu0 0.0
    %1462 = vmatpush1.msra.mxu0 0.0
    %1463 = vmatprep.subr.mxu0 0.0
    %1464 = vmatpush1.msra.mxu0 0.0
    %1465 = vmatprep.subr.mxu0 0.0
    %1466 = vmatpush1.msra.mxu0 0.0
    %1467 = vmatprep.subr.mxu0 0.0
    %1468 = vmatpush1.msra.mxu0 0.0
    %1469 = vmatprep.subr.mxu0 0.0
    %1470 = vmatpush1.msra.mxu0 0.0
    %1471 = vmatprep.subr.mxu0 0.0
    %1472 = vmatpush1.msra.mxu0 0.0
    %1473 = vmatprep.subr.mxu0 0.0
    %1474 = vmatpush1.msra.mxu0 0.0
    %1475 = vmatprep.subr.mxu0 0.0
    %1476 = vmatpush1.msra.mxu0 0.0
    %1477 = vmatprep.subr.mxu0 0.0
    %1478 = vmatpush1.msra.mxu0 0.0
    %1479 = vmatprep.subr.mxu0 0.0
    %1480 = vmatpush1.msra.mxu0 0.0
    %1481 = vmatprep.subr.mxu0 0.0
    %1482 = vmatpush1.msra.mxu0 0.0
    %1483 = vmatprep.subr.mxu0 0.0
    %1484 = vmatpush1.msra.mxu0 0.0
    %1485 = vmatprep.subr.mxu0 0.0
    %1486 = vmatpush1.msra.mxu0 0.0
    %1487 = vmatprep.subr.mxu0 0.0
    %1488 = vmatpush1.msra.mxu0 0.0
    %1489 = vmatprep.subr.mxu0 0.0
    %1490 = vmatpush1.msra.mxu0 0.0
    %1491 = vmatprep.subr.mxu0 0.0
    %1492 = vmatpush1.msra.mxu0 0.0
    %1493 = vmatprep.subr.mxu0 0.0
    %1494 = vmatpush1.msra.mxu0 0.0
    %1495 = vmatprep.subr.mxu0 0.0
    %1496 = vmatpush1.msra.mxu0 0.0
    %1497 = vmatprep.subr.mxu0 0.0
    %1498 = vmatpush1.msra.mxu0 0.0
    %1499 = vmatprep.subr.mxu0 0.0
    %1500 = vmatpush1.msra.mxu0 0.0
    %1501 = vmatprep.subr.mxu0 0.0
    %1502 = vmatpush1.msra.mxu0 0.0
    %1503 = vmatprep.mubr.f32.mxu0 0.0
    %1504 = vmatmul.mubr.f32.gmra.mrb[0].mxu0 %v1437
    %v1505 = vpop.f32.mrb[0].mxu0
    %v1506 = vadd.f32 %v1433, %v1505
    %v1507 = vpop.f32.mrb[0].mxu0
    %1508 = vdwg.mxu0
    %v1509 = vxor.u32 %v1506, 2147483648
    %v1510 = vmul.f32 %v1509, 1.442695
    %v1511 = vpow.pop %v1510
    %v1512 = vadd.f32 %v1511, 1.0
    %v1513 = vrcp.pop %v1512
    %v1514 = vmul.f32 1.0, %v1513
    %v1515 = vtanh.pop %v1506
    %v1516 = vmul.f32 %v1514, %v1426
    %1518 = vrot.lane.b32.xlu0 %v1515, 64
    %v1519 = vpop.permute.xlu0 %1518
    %v1521 = vmul.f32 %v1514, %v1519
    %1523 = vrot.lane.b32.xlu0 %v1521, 32
    %v1524 = vpop.permute.xlu0 %1523
    %v1526 = vadd.f32 %v1516, %v1524
    %v1527 = vtanh.pop %v1526
    %1529 = vrot.lane.b32.xlu0 %v1527, 64
    %v1530 = vpop.permute.xlu0 %1529
    %v1532 = vmul.f32 %v1514, %v1530
    %v1533 = vld [vmem:[#allocation3 + $0x4] sm:$0x3]
    %1535 = vrot.lane.b32.xlu0 %v1532, 32
    %v1536 = vpop.permute.xlu0 %1535
    %v1537 = vsel %vm314, %v1536, 0
    %1539 = vmatprep.subr.mxu0 0.0
    %1540 = vmatpush1.msra.mxu0 %v1334
    %1541 = vmatprep.subr.mxu0 0.0
    %1542 = vmatpush1.msra.mxu0 %v1335
    %1543 = vmatprep.subr.mxu0 0.0
    %1544 = vmatpush1.msra.mxu0 %v1336
    %1545 = vmatprep.subr.mxu0 0.0
    %1546 = vmatpush1.msra.mxu0 %v1337
    %1547 = vmatprep.subr.mxu0 0.0
    %1548 = vmatpush1.msra.mxu0 0.0
    %1549 = vmatprep.subr.mxu0 0.0
    %1550 = vmatpush1.msra.mxu0 0.0
    %1551 = vmatprep.subr.mxu0 0.0
    %1552 = vmatpush1.msra.mxu0 0.0
    %1553 = vmatprep.subr.mxu0 0.0
    %1554 = vmatpush1.msra.mxu0 0.0
    %1555 = vmatprep.subr.mxu0 0.0
    %1556 = vmatpush1.msra.mxu0 0.0
    %1557 = vmatprep.subr.mxu0 0.0
    %1558 = vmatpush1.msra.mxu0 0.0
    %1559 = vmatprep.subr.mxu0 0.0
    %1560 = vmatpush1.msra.mxu0 0.0
    %1561 = vmatprep.subr.mxu0 0.0
    %1562 = vmatpush1.msra.mxu0 0.0
    %1563 = vmatprep.subr.mxu0 0.0
    %1564 = vmatpush1.msra.mxu0 0.0
    %1565 = vmatprep.subr.mxu0 0.0
    %1566 = vmatpush1.msra.mxu0 0.0
    %1567 = vmatprep.subr.mxu0 0.0
    %1568 = vmatpush1.msra.mxu0 0.0
    %1569 = vmatprep.subr.mxu0 0.0
    %1570 = vmatpush1.msra.mxu0 0.0
    %1571 = vmatprep.subr.mxu0 0.0
    %1572 = vmatpush1.msra.mxu0 0.0
    %1573 = vmatprep.subr.mxu0 0.0
    %1574 = vmatpush1.msra.mxu0 0.0
    %1575 = vmatprep.subr.mxu0 0.0
    %1576 = vmatpush1.msra.mxu0 0.0
    %1577 = vmatprep.subr.mxu0 0.0
    %1578 = vmatpush1.msra.mxu0 0.0
    %1579 = vmatprep.subr.mxu0 0.0
    %1580 = vmatpush1.msra.mxu0 0.0
    %1581 = vmatprep.subr.mxu0 0.0
    %1582 = vmatpush1.msra.mxu0 0.0
    %1583 = vmatprep.subr.mxu0 0.0
    %1584 = vmatpush1.msra.mxu0 0.0
    %1585 = vmatprep.subr.mxu0 0.0
    %1586 = vmatpush1.msra.mxu0 0.0
    %1587 = vmatprep.subr.mxu0 0.0
    %1588 = vmatpush1.msra.mxu0 0.0
    %1589 = vmatprep.subr.mxu0 0.0
    %1590 = vmatpush1.msra.mxu0 0.0
    %1591 = vmatprep.subr.mxu0 0.0
    %1592 = vmatpush1.msra.mxu0 0.0
    %1593 = vmatprep.subr.mxu0 0.0
    %1594 = vmatpush1.msra.mxu0 0.0
    %1595 = vmatprep.subr.mxu0 0.0
    %1596 = vmatpush1.msra.mxu0 0.0
    %1597 = vmatprep.subr.mxu0 0.0
    %1598 = vmatpush1.msra.mxu0 0.0
    %1599 = vmatprep.subr.mxu0 0.0
    %1600 = vmatpush1.msra.mxu0 0.0
    %1601 = vmatprep.subr.mxu0 0.0
    %1602 = vmatpush1.msra.mxu0 0.0
    %1603 = vmatprep.mubr.f32.mxu0 0.0
    %1604 = vmatmul.mubr.f32.gmra.mrb[0].mxu0 %v1537
    %v1605 = vpop.f32.mrb[0].mxu0
    %v1606 = vadd.f32 %v1533, %v1605
    %v1607 = vpop.f32.mrb[0].mxu0
    %1608 = vdwg.mxu0
    %v1609 = vxor.u32 %v1606, 2147483648
    %v1610 = vmul.f32 %v1609, 1.442695
    %v1611 = vpow.pop %v1610
    %v1612 = vadd.f32 %v1611, 1.0
    %v1613 = vrcp.pop %v1612
    %v1614 = vmul.f32 1.0, %v1613
    %v1615 = vtanh.pop %v1606
    %v1616 = vmul.f32 %v1614, %v1526
    %1618 = vrot.lane.b32.xlu0 %v1615, 64
    %v1619 = vpop.permute.xlu0 %1618
    %v1621 = vmul.f32 %v1614, %v1619
    %1623 = vrot.lane.b32.xlu0 %v1621, 32
    %v1624 = vpop.permute.xlu0 %1623
    %v1626 = vadd.f32 %v1616, %v1624
    %v1627 = vtanh.pop %v1626
    %1629 = vrot.lane.b32.xlu0 %v1627, 64
    %v1630 = vpop.permute.xlu0 %1629
    %v1632 = vmul.f32 %v1614, %v1630
    %v1633 = vld [vmem:[#allocation3 + $0x6] sm:$0x3]
    %1635 = vrot.lane.b32.xlu0 %v1632, 32
    %v1636 = vpop.permute.xlu0 %1635
    %v1637 = vsel %vm314, %v1636, 0
    %1639 = vmatprep.subr.mxu0 0.0
    %1640 = vmatpush1.msra.mxu0 %v1334
    %1641 = vmatprep.subr.mxu0 0.0
    %1642 = vmatpush1.msra.mxu0 %v1335
    %1643 = vmatprep.subr.mxu0 0.0
    %1644 = vmatpush1.msra.mxu0 %v1336
    %1645 = vmatprep.subr.mxu0 0.0
    %1646 = vmatpush1.msra.mxu0 %v1337
    %1647 = vmatprep.subr.mxu0 0.0
    %1648 = vmatpush1.msra.mxu0 0.0
    %1649 = vmatprep.subr.mxu0 0.0
    %1650 = vmatpush1.msra.mxu0 0.0
    %1651 = vmatprep.subr.mxu0 0.0
    %1652 = vmatpush1.msra.mxu0 0.0
    %1653 = vmatprep.subr.mxu0 0.0
    %1654 = vmatpush1.msra.mxu0 0.0
    %1655 = vmatprep.subr.mxu0 0.0
    %1656 = vmatpush1.msra.mxu0 0.0
    %1657 = vmatprep.subr.mxu0 0.0
    %1658 = vmatpush1.msra.mxu0 0.0
    %1659 = vmatprep.subr.mxu0 0.0
    %1660 = vmatpush1.msra.mxu0 0.0
    %1661 = vmatprep.subr.mxu0 0.0
    %1662 = vmatpush1.msra.mxu0 0.0
    %1663 = vmatprep.subr.mxu0 0.0
    %1664 = vmatpush1.msra.mxu0 0.0
    %1665 = vmatprep.subr.mxu0 0.0
    %1666 = vmatpush1.msra.mxu0 0.0
    %1667 = vmatprep.subr.mxu0 0.0
    %1668 = vmatpush1.msra.mxu0 0.0
    %1669 = vmatprep.subr.mxu0 0.0
    %1670 = vmatpush1.msra.mxu0 0.0
    %1671 = vmatprep.subr.mxu0 0.0
    %1672 = vmatpush1.msra.mxu0 0.0
    %1673 = vmatprep.subr.mxu0 0.0
    %1674 = vmatpush1.msra.mxu0 0.0
    %1675 = vmatprep.subr.mxu0 0.0
    %1676 = vmatpush1.msra.mxu0 0.0
    %1677 = vmatprep.subr.mxu0 0.0
    %1678 = vmatpush1.msra.mxu0 0.0
    %1679 = vmatprep.subr.mxu0 0.0
    %1680 = vmatpush1.msra.mxu0 0.0
    %1681 = vmatprep.subr.mxu0 0.0
    %1682 = vmatpush1.msra.mxu0 0.0
    %1683 = vmatprep.subr.mxu0 0.0
    %1684 = vmatpush1.msra.mxu0 0.0
    %1685 = vmatprep.subr.mxu0 0.0
    %1686 = vmatpush1.msra.mxu0 0.0
    %1687 = vmatprep.subr.mxu0 0.0
    %1688 = vmatpush1.msra.mxu0 0.0
    %1689 = vmatprep.subr.mxu0 0.0
    %1690 = vmatpush1.msra.mxu0 0.0
    %1691 = vmatprep.subr.mxu0 0.0
    %1692 = vmatpush1.msra.mxu0 0.0
    %1693 = vmatprep.subr.mxu0 0.0
    %1694 = vmatpush1.msra.mxu0 0.0
    %1695 = vmatprep.subr.mxu0 0.0
    %1696 = vmatpush1.msra.mxu0 0.0
    %1697 = vmatprep.subr.mxu0 0.0
    %1698 = vmatpush1.msra.mxu0 0.0
    %1699 = vmatprep.subr.mxu0 0.0
    %1700 = vmatpush1.msra.mxu0 0.0
    %1701 = vmatprep.subr.mxu0 0.0
    %1702 = vmatpush1.msra.mxu0 0.0
    %1703 = vmatprep.mubr.f32.mxu0 0.0
    %1704 = vmatmul.mubr.f32.gmra.mrb[0].mxu0 %v1637
    %v1705 = vpop.f32.mrb[0].mxu0
    %v1706 = vadd.f32 %v1633, %v1705
    %v1707 = vpop.f32.mrb[0].mxu0
    %1708 = vdwg.mxu0
    %v1709 = vxor.u32 %v1706, 2147483648
    %v1710 = vmul.f32 %v1709, 1.442695
    %v1711 = vpow.pop %v1710
    %v1712 = vadd.f32 %v1711, 1.0
    %v1713 = vrcp.pop %v1712
    %v1714 = vmul.f32 1.0, %v1713
    %v1715 = vtanh.pop %v1706
    %v1716 = vmul.f32 %v1714, %v1626
    %1718 = vrot.lane.b32.xlu0 %v1715, 64
    %v1719 = vpop.permute.xlu0 %1718
    %v1721 = vmul.f32 %v1714, %v1719
    %1723 = vrot.lane.b32.xlu0 %v1721, 32
    %v1724 = vpop.permute.xlu0 %1723
    %v1726 = vadd.f32 %v1716, %v1724
    %v1727 = vtanh.pop %v1726
    %1729 = vrot.lane.b32.xlu0 %v1727, 64
    %v1730 = vpop.permute.xlu0 %1729
    %v1732 = vmul.f32 %v1714, %v1730
    %v1733 = vld [vmem:[#allocation3 + $0x8] sm:$0x3]
    %1735 = vrot.lane.b32.xlu0 %v1732, 32
    %v1736 = vpop.permute.xlu0 %1735
    %v1737 = vsel %vm314, %v1736, 0
    %1739 = vmatprep.subr.mxu0 0.0
    %1740 = vmatpush1.msra.mxu0 %v1334
    %1741 = vmatprep.subr.mxu0 0.0
    %1742 = vmatpush1.msra.mxu0 %v1335
    %1743 = vmatprep.subr.mxu0 0.0
    %1744 = vmatpush1.msra.mxu0 %v1336
    %1745 = vmatprep.subr.mxu0 0.0
    %1746 = vmatpush1.msra.mxu0 %v1337
    %1747 = vmatprep.subr.mxu0 0.0
    %1748 = vmatpush1.msra.mxu0 0.0
    %1749 = vmatprep.subr.mxu0 0.0
    %1750 = vmatpush1.msra.mxu0 0.0
    %1751 = vmatprep.subr.mxu0 0.0
    %1752 = vmatpush1.msra.mxu0 0.0
    %1753 = vmatprep.subr.mxu0 0.0
    %1754 = vmatpush1.msra.mxu0 0.0
    %1755 = vmatprep.subr.mxu0 0.0
    %1756 = vmatpush1.msra.mxu0 0.0
    %1757 = vmatprep.subr.mxu0 0.0
    %1758 = vmatpush1.msra.mxu0 0.0
    %1759 = vmatprep.subr.mxu0 0.0
    %1760 = vmatpush1.msra.mxu0 0.0
    %1761 = vmatprep.subr.mxu0 0.0
    %1762 = vmatpush1.msra.mxu0 0.0
    %1763 = vmatprep.subr.mxu0 0.0
    %1764 = vmatpush1.msra.mxu0 0.0
    %1765 = vmatprep.subr.mxu0 0.0
    %1766 = vmatpush1.msra.mxu0 0.0
    %1767 = vmatprep.subr.mxu0 0.0
    %1768 = vmatpush1.msra.mxu0 0.0
    %1769 = vmatprep.subr.mxu0 0.0
    %1770 = vmatpush1.msra.mxu0 0.0
    %1771 = vmatprep.subr.mxu0 0.0
    %1772 = vmatpush1.msra.mxu0 0.0
    %1773 = vmatprep.subr.mxu0 0.0
    %1774 = vmatpush1.msra.mxu0 0.0
    %1775 = vmatprep.subr.mxu0 0.0
    %1776 = vmatpush1.msra.mxu0 0.0
    %1777 = vmatprep.subr.mxu0 0.0
    %1778 = vmatpush1.msra.mxu0 0.0
    %1779 = vmatprep.subr.mxu0 0.0
    %1780 = vmatpush1.msra.mxu0 0.0
    %1781 = vmatprep.subr.mxu0 0.0
    %1782 = vmatpush1.msra.mxu0 0.0
    %1783 = vmatprep.subr.mxu0 0.0
    %1784 = vmatpush1.msra.mxu0 0.0
    %1785 = vmatprep.subr.mxu0 0.0
    %1786 = vmatpush1.msra.mxu0 0.0
    %1787 = vmatprep.subr.mxu0 0.0
    %1788 = vmatpush1.msra.mxu0 0.0
    %1789 = vmatprep.subr.mxu0 0.0
    %1790 = vmatpush1.msra.mxu0 0.0
    %1791 = vmatprep.subr.mxu0 0.0
    %1792 = vmatpush1.msra.mxu0 0.0
    %1793 = vmatprep.subr.mxu0 0.0
    %1794 = vmatpush1.msra.mxu0 0.0
    %1795 = vmatprep.subr.mxu0 0.0
    %1796 = vmatpush1.msra.mxu0 0.0
    %1797 = vmatprep.subr.mxu0 0.0
    %1798 = vmatpush1.msra.mxu0 0.0
    %1799 = vmatprep.subr.mxu0 0.0
    %1800 = vmatpush1.msra.mxu0 0.0
    %1801 = vmatprep.subr.mxu0 0.0
    %1802 = vmatpush1.msra.mxu0 0.0
    %1803 = vmatprep.mubr.f32.mxu0 0.0
    %1804 = vmatmul.mubr.f32.gmra.mrb[0].mxu0 %v1737
    %v1805 = vpop.f32.mrb[0].mxu0
    %v1806 = vadd.f32 %v1733, %v1805
    %v1807 = vpop.f32.mrb[0].mxu0
    %1808 = vdwg.mxu0
    %v1809 = vxor.u32 %v1806, 2147483648
    %v1810 = vmul.f32 %v1809, 1.442695
    %v1811 = vpow.pop %v1810
    %v1812 = vadd.f32 %v1811, 1.0
    %v1813 = vrcp.pop %v1812
    %v1814 = vmul.f32 1.0, %v1813
    %v1815 = vtanh.pop %v1806
    %v1816 = vmul.f32 %v1814, %v1726
    %1818 = vrot.lane.b32.xlu0 %v1815, 64
    %v1819 = vpop.permute.xlu0 %1818
    %v1821 = vmul.f32 %v1814, %v1819
    %1823 = vrot.lane.b32.xlu0 %v1821, 32
    %v1824 = vpop.permute.xlu0 %1823
    %v1826 = vadd.f32 %v1816, %v1824
    %v1827 = vtanh.pop %v1826
    %1829 = vrot.lane.b32.xlu0 %v1827, 64
    %v1830 = vpop.permute.xlu0 %1829
    %v1832 = vmul.f32 %v1814, %v1830
    %v1833 = vld [vmem:[#allocation3 + $0xa] sm:$0x3]
    %1835 = vrot.lane.b32.xlu0 %v1832, 32
    %v1836 = vpop.permute.xlu0 %1835
    %v1837 = vsel %vm314, %v1836, 0
    %1839 = vmatprep.subr.mxu0 0.0
    %1840 = vmatpush1.msra.mxu0 %v1334
    %1841 = vmatprep.subr.mxu0 0.0
    %1842 = vmatpush1.msra.mxu0 %v1335
    %1843 = vmatprep.subr.mxu0 0.0
    %1844 = vmatpush1.msra.mxu0 %v1336
    %1845 = vmatprep.subr.mxu0 0.0
    %1846 = vmatpush1.msra.mxu0 %v1337
    %1847 = vmatprep.subr.mxu0 0.0
    %1848 = vmatpush1.msra.mxu0 0.0
    %1849 = vmatprep.subr.mxu0 0.0
    %1850 = vmatpush1.msra.mxu0 0.0
    %1851 = vmatprep.subr.mxu0 0.0
    %1852 = vmatpush1.msra.mxu0 0.0
    %1853 = vmatprep.subr.mxu0 0.0
    %1854 = vmatpush1.msra.mxu0 0.0
    %1855 = vmatprep.subr.mxu0 0.0
    %1856 = vmatpush1.msra.mxu0 0.0
    %1857 = vmatprep.subr.mxu0 0.0
    %1858 = vmatpush1.msra.mxu0 0.0
    %1859 = vmatprep.subr.mxu0 0.0
    %1860 = vmatpush1.msra.mxu0 0.0
    %1861 = vmatprep.subr.mxu0 0.0
    %1862 = vmatpush1.msra.mxu0 0.0
    %1863 = vmatprep.subr.mxu0 0.0
    %1864 = vmatpush1.msra.mxu0 0.0
    %1865 = vmatprep.subr.mxu0 0.0
    %1866 = vmatpush1.msra.mxu0 0.0
    %1867 = vmatprep.subr.mxu0 0.0
    %1868 = vmatpush1.msra.mxu0 0.0
    %1869 = vmatprep.subr.mxu0 0.0
    %1870 = vmatpush1.msra.mxu0 0.0
    %1871 = vmatprep.subr.mxu0 0.0
    %1872 = vmatpush1.msra.mxu0 0.0
    %1873 = vmatprep.subr.mxu0 0.0
    %1874 = vmatpush1.msra.mxu0 0.0
    %1875 = vmatprep.subr.mxu0 0.0
    %1876 = vmatpush1.msra.mxu0 0.0
    %1877 = vmatprep.subr.mxu0 0.0
    %1878 = vmatpush1.msra.mxu0 0.0
    %1879 = vmatprep.subr.mxu0 0.0
    %1880 = vmatpush1.msra.mxu0 0.0
    %1881 = vmatprep.subr.mxu0 0.0
    %1882 = vmatpush1.msra.mxu0 0.0
    %1883 = vmatprep.subr.mxu0 0.0
    %1884 = vmatpush1.msra.mxu0 0.0
    %1885 = vmatprep.subr.mxu0 0.0
    %1886 = vmatpush1.msra.mxu0 0.0
    %1887 = vmatprep.subr.mxu0 0.0
    %1888 = vmatpush1.msra.mxu0 0.0
    %1889 = vmatprep.subr.mxu0 0.0
    %1890 = vmatpush1.msra.mxu0 0.0
    %1891 = vmatprep.subr.mxu0 0.0
    %1892 = vmatpush1.msra.mxu0 0.0
    %1893 = vmatprep.subr.mxu0 0.0
    %1894 = vmatpush1.msra.mxu0 0.0
    %1895 = vmatprep.subr.mxu0 0.0
    %1896 = vmatpush1.msra.mxu0 0.0
    %1897 = vmatprep.subr.mxu0 0.0
    %1898 = vmatpush1.msra.mxu0 0.0
    %1899 = vmatprep.subr.mxu0 0.0
    %1900 = vmatpush1.msra.mxu0 0.0
    %1901 = vmatprep.subr.mxu0 0.0
    %1902 = vmatpush1.msra.mxu0 0.0
    %1903 = vmatprep.mubr.f32.mxu0 0.0
    %1904 = vmatmul.mubr.f32.gmra.mrb[0].mxu0 %v1837
    %v1905 = vpop.f32.mrb[0].mxu0
    %v1906 = vadd.f32 %v1833, %v1905
    %v1907 = vpop.f32.mrb[0].mxu0
    %1908 = vdwg.mxu0
    %v1909 = vxor.u32 %v1906, 2147483648
    %v1910 = vmul.f32 %v1909, 1.442695
    %v1911 = vpow.pop %v1910
    %v1912 = vadd.f32 %v1911, 1.0
    %v1913 = vrcp.pop %v1912
    %v1914 = vmul.f32 1.0, %v1913
    %v1915 = vtanh.pop %v1906
    %v1916 = vmul.f32 %v1914, %v1826
    %1918 = vrot.lane.b32.xlu0 %v1915, 64
    %v1919 = vpop.permute.xlu0 %1918
    %v1921 = vmul.f32 %v1914, %v1919
    %1923 = vrot.lane.b32.xlu0 %v1921, 32
    %v1924 = vpop.permute.xlu0 %1923
    %v1926 = vadd.f32 %v1916, %v1924
    %v1927 = vtanh.pop %v1926
    %1929 = vrot.lane.b32.xlu0 %v1927, 64
    %v1930 = vpop.permute.xlu0 %1929
    %v1932 = vmul.f32 %v1914, %v1930
    %v1933 = vld [vmem:[#allocation3 + $0xc] sm:$0x3]
    %1935 = vrot.lane.b32.xlu0 %v1932, 32
    %v1936 = vpop.permute.xlu0 %1935
    %v1937 = vsel %vm314, %v1936, 0
    %1939 = vmatprep.subr.mxu0 0.0
    %1940 = vmatpush1.msra.mxu0 %v1334
    %1941 = vmatprep.subr.mxu0 0.0
    %1942 = vmatpush1.msra.mxu0 %v1335
    %1943 = vmatprep.subr.mxu0 0.0
    %1944 = vmatpush1.msra.mxu0 %v1336
    %1945 = vmatprep.subr.mxu0 0.0
    %1946 = vmatpush1.msra.mxu0 %v1337
    %1947 = vmatprep.subr.mxu0 0.0
    %1948 = vmatpush1.msra.mxu0 0.0
    %1949 = vmatprep.subr.mxu0 0.0
    %1950 = vmatpush1.msra.mxu0 0.0
    %1951 = vmatprep.subr.mxu0 0.0
    %1952 = vmatpush1.msra.mxu0 0.0
    %1953 = vmatprep.subr.mxu0 0.0
    %1954 = vmatpush1.msra.mxu0 0.0
    %1955 = vmatprep.subr.mxu0 0.0
    %1956 = vmatpush1.msra.mxu0 0.0
    %1957 = vmatprep.subr.mxu0 0.0
    %1958 = vmatpush1.msra.mxu0 0.0
    %1959 = vmatprep.subr.mxu0 0.0
    %1960 = vmatpush1.msra.mxu0 0.0
    %1961 = vmatprep.subr.mxu0 0.0
    %1962 = vmatpush1.msra.mxu0 0.0
    %1963 = vmatprep.subr.mxu0 0.0
    %1964 = vmatpush1.msra.mxu0 0.0
    %1965 = vmatprep.subr.mxu0 0.0
    %1966 = vmatpush1.msra.mxu0 0.0
    %1967 = vmatprep.subr.mxu0 0.0
    %1968 = vmatpush1.msra.mxu0 0.0
    %1969 = vmatprep.subr.mxu0 0.0
    %1970 = vmatpush1.msra.mxu0 0.0
    %1971 = vmatprep.subr.mxu0 0.0
    %1972 = vmatpush1.msra.mxu0 0.0
    %1973 = vmatprep.subr.mxu0 0.0
    %1974 = vmatpush1.msra.mxu0 0.0
    %1975 = vmatprep.subr.mxu0 0.0
    %1976 = vmatpush1.msra.mxu0 0.0
    %1977 = vmatprep.subr.mxu0 0.0
    %1978 = vmatpush1.msra.mxu0 0.0
    %1979 = vmatprep.subr.mxu0 0.0
    %1980 = vmatpush1.msra.mxu0 0.0
    %1981 = vmatprep.subr.mxu0 0.0
    %1982 = vmatpush1.msra.mxu0 0.0
    %1983 = vmatprep.subr.mxu0 0.0
    %1984 = vmatpush1.msra.mxu0 0.0
    %1985 = vmatprep.subr.mxu0 0.0
    %1986 = vmatpush1.msra.mxu0 0.0
    %1987 = vmatprep.subr.mxu0 0.0
    %1988 = vmatpush1.msra.mxu0 0.0
    %1989 = vmatprep.subr.mxu0 0.0
    %1990 = vmatpush1.msra.mxu0 0.0
    %1991 = vmatprep.subr.mxu0 0.0
    %1992 = vmatpush1.msra.mxu0 0.0
    %1993 = vmatprep.subr.mxu0 0.0
    %1994 = vmatpush1.msra.mxu0 0.0
    %1995 = vmatprep.subr.mxu0 0.0
    %1996 = vmatpush1.msra.mxu0 0.0
    %1997 = vmatprep.subr.mxu0 0.0
    %1998 = vmatpush1.msra.mxu0 0.0
    %1999 = vmatprep.subr.mxu0 0.0
    %2000 = vmatpush1.msra.mxu0 0.0
    %2001 = vmatprep.subr.mxu0 0.0
    %2002 = vmatpush1.msra.mxu0 0.0
    %2003 = vmatprep.mubr.f32.mxu0 0.0
    %2004 = vmatmul.mubr.f32.gmra.mrb[0].mxu0 %v1937
    %v2005 = vpop.f32.mrb[0].mxu0
    %v2006 = vadd.f32 %v1933, %v2005
    %v2007 = vpop.f32.mrb[0].mxu0
    %2008 = vdwg.mxu0
    %v2009 = vxor.u32 %v2006, 2147483648
    %v2010 = vmul.f32 %v2009, 1.442695
    %v2011 = vpow.pop %v2010
    %v2012 = vadd.f32 %v2011, 1.0
    %v2013 = vrcp.pop %v2012
    %v2014 = vmul.f32 1.0, %v2013
    %v2015 = vtanh.pop %v2006
    %v2016 = vmul.f32 %v2014, %v1926
    %2018 = vrot.lane.b32.xlu0 %v2015, 64
    %v2019 = vpop.permute.xlu0 %2018
    %v2021 = vmul.f32 %v2014, %v2019
    %2023 = vrot.lane.b32.xlu0 %v2021, 32
    %v2024 = vpop.permute.xlu0 %2023
    %v2026 = vadd.f32 %v2016, %v2024
    %v2027 = vtanh.pop %v2026
    %2029 = vrot.lane.b32.xlu0 %v2027, 64
    %v2030 = vpop.permute.xlu0 %2029
    %v2032 = vmul.f32 %v2014, %v2030
    %v2033 = vld [vmem:[%s10] sm:$0x1]
    %v2035 = vlaneseq
    %v2036 = vshrl.u32 %v2035, 7
    %v2037 = vsub.s32 0, %v2036
    %v2038 = vrot.slane %v2033, %v2037
    %2039 = vrot.lane.b32.xlu0 %v2038, 96
    %v2040 = vpop.permute.xlu0 %2039
    %v2042 = vmul.f32 %v2032, %v2040
    %2044 = vrot.lane.b32.xlu0 %v2042, 32
    %v2045 = vpop.permute.xlu0 %2044
    %v2047 = vsel %vm519, %v2045, 0.0
    %2048 = vadd.xlane.f32.xlu0 %v2047
    %v2049 = vpop.xlane.xlu0 %2048
    %v2050 = vadd.f32 %v2049, %v212
    %v2051 = vld [vmem:[#allocation4] sm:$0x1]
    %v2053 = vlaneseq
    %v2054 = vshrl.u32 %v2053, 7
    %v2055 = vsub.s32 0, %v2054
    %v2056 = vrot.slane %v2051, %v2055
    %v2058 = vadd.f32 %v2050, %v2056
    %vm2059 = vcmp.gt.f32.partialorder %v2058, 20.0
    %v2060 = vmin.f32 %v2058, 20.0
    %v2061 = vmul.f32 %v2060, 1.442695
    %v2062 = vpow.pop %v2061
    %v2063 = vadd.f32 %v2062, 1.0
    %v2064 = vlog2.pop %v2063
    %v2065 = vmul.f32 %v2064, 0.6931472
    %v2066 = vmul.f32 -0.5, %v2062
    %v2067 = vadd.f32 %v2066, 1.0
    %v2068 = vmul.f32 %v2067, %v2062
    %v2069 = vand.u32 2147483647, %v2062
    %vm2070 = vcmp.lt.f32.partialorder %v2069, 0.0004427343
    %v2071 = vsel %vm2070, %v2068, %v2065
    %v2072 = vsel %vm2059, %v2058, %v2071
    %vm2073 = vcmask 1024
    %2074 = vst.msk [vmem:[#allocation14] sm:$0x3] %vm2073, %v2072
    %v2075 = vld [vmem:[#allocation3 + $0xe] sm:$0x3]
    %2077 = vrot.lane.b32.xlu0 %v2032, 32
    %v2078 = vpop.permute.xlu0 %2077
    %v2079 = vsel %vm314, %v2078, 0
    %2081 = vmatprep.subr.mxu0 0.0
    %2082 = vmatpush1.msra.mxu0 %v1334
    %2083 = vmatprep.subr.mxu0 0.0
    %2084 = vmatpush1.msra.mxu0 %v1335
    %2085 = vmatprep.subr.mxu0 0.0
    %2086 = vmatpush1.msra.mxu0 %v1336
    %2087 = vmatprep.subr.mxu0 0.0
    %2088 = vmatpush1.msra.mxu0 %v1337
    %2089 = vmatprep.subr.mxu0 0.0
    %2090 = vmatpush1.msra.mxu0 0.0
    %2091 = vmatprep.subr.mxu0 0.0
    %2092 = vmatpush1.msra.mxu0 0.0
    %2093 = vmatprep.subr.mxu0 0.0
    %2094 = vmatpush1.msra.mxu0 0.0
    %2095 = vmatprep.subr.mxu0 0.0
    %2096 = vmatpush1.msra.mxu0 0.0
    %2097 = vmatprep.subr.mxu0 0.0
    %2098 = vmatpush1.msra.mxu0 0.0
    %2099 = vmatprep.subr.mxu0 0.0
    %2100 = vmatpush1.msra.mxu0 0.0
    %2101 = vmatprep.subr.mxu0 0.0
    %2102 = vmatpush1.msra.mxu0 0.0
    %2103 = vmatprep.subr.mxu0 0.0
    %2104 = vmatpush1.msra.mxu0 0.0
    %2105 = vmatprep.subr.mxu0 0.0
    %2106 = vmatpush1.msra.mxu0 0.0
    %2107 = vmatprep.subr.mxu0 0.0
    %2108 = vmatpush1.msra.mxu0 0.0
    %2109 = vmatprep.subr.mxu0 0.0
    %2110 = vmatpush1.msra.mxu0 0.0
    %2111 = vmatprep.subr.mxu0 0.0
    %2112 = vmatpush1.msra.mxu0 0.0
    %2113 = vmatprep.subr.mxu0 0.0
    %2114 = vmatpush1.msra.mxu0 0.0
    %2115 = vmatprep.subr.mxu0 0.0
    %2116 = vmatpush1.msra.mxu0 0.0
    %2117 = vmatprep.subr.mxu0 0.0
    %2118 = vmatpush1.msra.mxu0 0.0
    %2119 = vmatprep.subr.mxu0 0.0
    %2120 = vmatpush1.msra.mxu0 0.0
    %2121 = vmatprep.subr.mxu0 0.0
    %2122 = vmatpush1.msra.mxu0 0.0
    %2123 = vmatprep.subr.mxu0 0.0
    %2124 = vmatpush1.msra.mxu0 0.0
    %2125 = vmatprep.subr.mxu0 0.0
    %2126 = vmatpush1.msra.mxu0 0.0
    %2127 = vmatprep.subr.mxu0 0.0
    %2128 = vmatpush1.msra.mxu0 0.0
    %2129 = vmatprep.subr.mxu0 0.0
    %2130 = vmatpush1.msra.mxu0 0.0
    %2131 = vmatprep.subr.mxu0 0.0
    %2132 = vmatpush1.msra.mxu0 0.0
    %2133 = vmatprep.subr.mxu0 0.0
    %2134 = vmatpush1.msra.mxu0 0.0
    %2135 = vmatprep.subr.mxu0 0.0
    %2136 = vmatpush1.msra.mxu0 0.0
    %2137 = vmatprep.subr.mxu0 0.0
    %2138 = vmatpush1.msra.mxu0 0.0
    %2139 = vmatprep.subr.mxu0 0.0
    %2140 = vmatpush1.msra.mxu0 0.0
    %2141 = vmatprep.subr.mxu0 0.0
    %2142 = vmatpush1.msra.mxu0 0.0
    %2143 = vmatprep.subr.mxu0 0.0
    %2144 = vmatpush1.msra.mxu0 0.0
    %2145 = vmatprep.mubr.f32.mxu0 0.0
    %2146 = vmatmul.mubr.f32.gmra.mrb[0].mxu0 %v2079
    %v2147 = vpop.f32.mrb[0].mxu0
    %v2148 = vadd.f32 %v2075, %v2147
    %v2149 = vpop.f32.mrb[0].mxu0
    %2150 = vdwg.mxu0
    %v2151 = vxor.u32 %v2148, 2147483648
    %v2152 = vmul.f32 %v2151, 1.442695
    %v2153 = vpow.pop %v2152
    %v2154 = vadd.f32 %v2153, 1.0
    %v2155 = vrcp.pop %v2154
    %v2156 = vmul.f32 1.0, %v2155
    %v2157 = vtanh.pop %v2148
    %v2158 = vmul.f32 %v2156, %v2026
    %2160 = vrot.lane.b32.xlu0 %v2157, 64
    %v2161 = vpop.permute.xlu0 %2160
    %v2163 = vmul.f32 %v2156, %v2161
    %2165 = vrot.lane.b32.xlu0 %v2163, 32
    %v2166 = vpop.permute.xlu0 %2165
    %v2168 = vadd.f32 %v2158, %v2166
    %v2169 = vtanh.pop %v2168
    %2171 = vrot.lane.b32.xlu0 %v2169, 64
    %v2172 = vpop.permute.xlu0 %2171
    %v2174 = vmul.f32 %v2156, %v2172
    %v2175 = vld [vmem:[%s10] sm:$0x1]
    %v2177 = vlaneseq
    %v2178 = vshrl.u32 %v2177, 7
    %v2179 = vsub.s32 0, %v2178
    %v2180 = vrot.slane %v2175, %v2179
    %2181 = vrot.lane.b32.xlu0 %v2180, 96
    %v2182 = vpop.permute.xlu0 %2181
    %v2184 = vmul.f32 %v2174, %v2182
    %2186 = vrot.lane.b32.xlu0 %v2184, 32
    %v2187 = vpop.permute.xlu0 %2186
    %v2189 = vsel %vm519, %v2187, 0.0
    %2190 = vadd.xlane.f32.xlu0 %v2189
    %v2191 = vpop.xlane.xlu0 %2190
    %v2192 = vadd.f32 %v2191, %v212
    %v2193 = vld [vmem:[#allocation4] sm:$0x1]
    %v2195 = vlaneseq
    %v2196 = vshrl.u32 %v2195, 7
    %v2197 = vsub.s32 0, %v2196
    %v2198 = vrot.slane %v2193, %v2197
    %v2200 = vadd.f32 %v2192, %v2198
    %vm2201 = vcmp.gt.f32.partialorder %v2200, 20.0
    %v2202 = vmin.f32 %v2200, 20.0
    %v2203 = vmul.f32 %v2202, 1.442695
    %v2204 = vpow.pop %v2203
    %v2205 = vadd.f32 %v2204, 1.0
    %v2206 = vlog2.pop %v2205
    %v2207 = vmul.f32 %v2206, 0.6931472
    %v2208 = vmul.f32 -0.5, %v2204
    %v2209 = vadd.f32 %v2208, 1.0
    %v2210 = vmul.f32 %v2209, %v2204
    %v2211 = vand.u32 2147483647, %v2204
    %vm2212 = vcmp.lt.f32.partialorder %v2211, 0.0004427343
    %v2213 = vsel %vm2212, %v2210, %v2207
    %v2214 = vsel %vm2201, %v2200, %v2213
    %2216 = vrot.lane.b32.xlu0 %v2214, 1
    %v2217 = vpop.permute.xlu0 %2216
    %vm2219 = vcmask 9224
    %2220 = vst.msk [vmem:[#allocation14] sm:$0x3] %vm2219, %v2217
    // Predicated region
    $region74: #{tpu_custom_call.1} parent=1 // pred_check
      _
    $region75: #{tpu_custom_call.1} parent=1 // pred_check_branch
      %2222 = sbr.rel (0) target = $region77
    $region76: #{tpu_custom_call.1} parent=1 // pred_region
      %s2224 = ssub.s32 32, 32
      %2225 = vsyncadd [#allocation7], %s2224
      %s2227 = sshll.u32 [#allocation14], 4
      %s2228 = int_to_ptr.vmem [resolvable:$true] %s2227
      %2230 = dma.vmem_to_hbm [thread:$0]  %s2228, 32, %s13, [#allocation7]
    $region77: #{tpu_custom_call.1} parent=1 // pred_fallthru
      _
    // Predicated region
    $region78: #{tpu_custom_call.1} parent=1 // pred_check
      _
    $region79: #{tpu_custom_call.1} parent=1 // pred_check_branch
      %2232 = sbr.rel (0) target = $region81
    $region80: #{tpu_custom_call.1} parent=1 // pred_region
      %2233 = dma.done [#allocation7], 32
    $region81: #{tpu_custom_call.1} parent=1 // pred_fallthru
      _
    %2234 = vsyncpa [#allocation6], 1
    %2235 = vsyncpa [#allocation9], 1
    %2236 = vsyncpa [#allocation12], 1
    %2237 = vsyncpa [#allocation7], 1

</llo_original>
